<compile_context>
chip_gen: v7x
topology: tpu7x:2x2x1
jax: 0.10.0
libtpu: 0.0.40
codegen_flags: <defaults>
</compile_context>

<pallas_src>
import functools
import math

import jax
import jax.numpy as jnp
from jax.experimental import pallas as pl
from jax.experimental.pallas import tpu as pltpu

LN_EPS = 1e-5


# ------------------------------ math helpers ------------------------------- #

def _layer_norm(x, gamma, beta):
    # single pass: E[x] and E[x^2] computed together
    mu = jnp.mean(x, axis=-1, keepdims=True)
    mu2 = jnp.mean(x * x, axis=-1, keepdims=True)
    var = mu2 - mu * mu
    return (x - mu) * jax.lax.rsqrt(var + LN_EPS) * gamma + beta


def _gelu_tanh(x):
    # Megatron's jit'ed gelu_impl (tanh approximation)
    return 0.5 * x * (1.0 + jnp.tanh(0.7978845608028654 * x * (1.0 + 0.044715 * x * x)))


# ----------------------------- Pallas kernels ------------------------------ #

def attn_block_kernel(x_ref, ln1_g, ln1_b, wqkv, bqkv, wproj, bproj, out_ref,
                      *, num_heads):
    """LN1 + fused QKV + batched multi-head causal attention + proj + residual."""
    x = x_ref[0]                                   # (S, H) fp32
    S, H = x.shape
    hd = H // num_heads

    h_ln = _layer_norm(x, ln1_g[...], ln1_b[...])  # fp32

    # fused QKV projection on the MXU (bf16 operands, fp32 accumulation)
    qkv = jnp.dot(h_ln.astype(jnp.bfloat16), wqkv[...],
                  preferred_element_type=jnp.float32) + bqkv[...]   # (S, 3H) fp32

    # [Q | K | V] split, then (heads, S, hd) layout for batched-head einsums
    q = jnp.transpose(qkv[:, 0 * H:1 * H].reshape(S, num_heads, hd), (1, 0, 2))
    k = jnp.transpose(qkv[:, 1 * H:2 * H].reshape(S, num_heads, hd), (1, 0, 2))
    v = jnp.transpose(qkv[:, 2 * H:3 * H].reshape(S, num_heads, hd), (1, 0, 2))

    # causal mask (boolean) + Megatron-style -10000 fill
    row = jax.lax.broadcasted_iota(jnp.int32, (S, S), 0)
    col = jax.lax.broadcasted_iota(jnp.int32, (S, S), 1)
    causal = col <= row                            # (S, S) bool
    scale = 1.0 / math.sqrt(hd)

    scores = jnp.einsum('nqd,nkd->nqk',
                        q.astype(jnp.bfloat16), k.astype(jnp.bfloat16),
                        preferred_element_type=jnp.float32) * scale   # (nh, S, S)
    scores = jnp.where(causal[None, :, :], scores, -10000.0)

    m = jnp.max(scores, axis=-1, keepdims=True)
    e = jnp.exp(scores - m)
    l = jnp.sum(e, axis=-1, keepdims=True)
    probs = e * pl.reciprocal(l, approx=True)      # EUP reciprocal

    ctx = jnp.einsum('nqk,nkd->nqd',
                     probs.astype(jnp.bfloat16), v.astype(jnp.bfloat16),
                     preferred_element_type=jnp.float32)              # (nh, S, hd)
    ctx = jnp.transpose(ctx, (1, 0, 2)).reshape(S, H)                 # (S, H) fp32

    attn_out = jnp.dot(ctx.astype(jnp.bfloat16), wproj[...],
                       preferred_element_type=jnp.float32) + bproj[...]
    out_ref[0] = x + attn_out                      # residual 1 (fp32)


def mlp_block_kernel(h_ref, ln2_g, ln2_b, wfc1, bfc1, wfc2, bfc2, out_ref):
    """LN2 + fc1 + gelu(tanh) + fc2 + residual, per (batch, seq-tile)."""
    h = h_ref[0]                                   # (TS, H) fp32
    h2 = _layer_norm(h, ln2_g[...], ln2_b[...])
    inter = _gelu_tanh(jnp.dot(h2.astype(jnp.bfloat16), wfc1[...],
                               preferred_element_type=jnp.float32) + bfc1[...])
    mlp_out = jnp.dot(inter.astype(jnp.bfloat16), wfc2[...],
                      preferred_element_type=jnp.float32) + bfc2[...]
    out_ref[0] = h + mlp_out                       # residual 2 (fp32)


def final_ln_kernel(x_ref, g_ref, b_ref, out_ref):
    """Final LayerNorm; output stored bf16 for the tied-embedding head matmul."""
    out_ref[0] = _layer_norm(x_ref[0], g_ref[...], b_ref[...]).astype(out_ref.dtype)


def lm_head_kernel(hln_ref, emb_ref, out_ref):
    """logits_tile = LN_f(h) @ emb_tile.T   (tied word embeddings, vocab-tiled)."""
    h = hln_ref[0]                                 # (S, H) bf16
    out_ref[0] = jax.lax.dot_general(
        h, emb_ref[...], (((1,), (1,)), ((), ())),
        preferred_element_type=jnp.float32)        # (S, TV) fp32


# ------------------------------ host wrappers ------------------------------ #

def _const_spec_1d(a):
    n = a.ndim
    return pl.BlockSpec(a.shape, lambda b, _n=n: (0,) * _n)


def _const_spec_2d(a):
    n = a.ndim
    return pl.BlockSpec(a.shape, lambda i, j, _n=n: (0,) * _n)


def _pick_tile(total, candidates):
    for t in candidates:
        if total % t == 0 and t <= total:
            return t
    return total


def run_attn_block(x, ln1_g, ln1_b, wqkv, bqkv, wproj, bproj, num_heads):
    B, S, H = x.shape
    weights = (ln1_g, ln1_b, wqkv, bqkv, wproj, bproj)
    in_specs = [pl.BlockSpec((1, S, H), lambda b: (b, 0, 0))]
    in_specs += [_const_spec_1d(w) for w in weights]
    return pl.pallas_call(
        functools.partial(attn_block_kernel, num_heads=num_heads),
        out_shape=jax.ShapeDtypeStruct((B, S, H), jnp.float32),
        grid=(B,),
        in_specs=in_specs,
        out_specs=pl.BlockSpec((1, S, H), lambda b: (b, 0, 0)),
        compiler_params=pltpu.CompilerParams(dimension_semantics=("parallel",)),
    )(x, *weights)


def run_mlp_block(h, ln2_g, ln2_b, wfc1, bfc1, wfc2, bfc2):
    B, S, H = h.shape
    TS = _pick_tile(S, (512, 256, 128, 64, 32, 16, 8))
    weights = (ln2_g, ln2_b, wfc1, bfc1, wfc2, bfc2)
    in_specs = [pl.BlockSpec((1, TS, H), lambda b, s: (b, s, 0))]
    in_specs += [_const_spec_2d(w) for w in weights]
    return pl.pallas_call(
        mlp_block_kernel,
        out_shape=jax.ShapeDtypeStruct((B, S, H), jnp.float32),
        grid=(B, S // TS),
        in_specs=in_specs,
        out_specs=pl.BlockSpec((1, TS, H), lambda b, s: (b, s, 0)),
        compiler_params=pltpu.CompilerParams(
            dimension_semantics=("parallel", "parallel")),
    )(h, *weights)


def run_final_ln(x, g, b):
    B, S, H = x.shape
    in_specs = [pl.BlockSpec((1, S, H), lambda bb: (bb, 0, 0)),
                _const_spec_1d(g), _const_spec_1d(b)]
    return pl.pallas_call(
        final_ln_kernel,
        out_shape=jax.ShapeDtypeStruct((B, S, H), jnp.bfloat16),
        grid=(B,),
        in_specs=in_specs,
        out_specs=pl.BlockSpec((1, S, H), lambda bb: (bb, 0, 0)),
        compiler_params=pltpu.CompilerParams(dimension_semantics=("parallel",)),
    )(x, g, b)


def run_lm_head(h_ln_bf16, emb_bf16):
    B, S, H = h_ln_bf16.shape
    V = emb_bf16.shape[0]
    TV = _pick_tile(V, (512, 256, 128))            # lane-dense vocab tiles
    in_specs = [pl.BlockSpec((1, S, H), lambda b, v: (b, 0, 0)),
                pl.BlockSpec((TV, H), lambda b, v: (v, 0))]
    return pl.pallas_call(
        lm_head_kernel,
        out_shape=jax.ShapeDtypeStruct((B, S, V), jnp.float32),
        grid=(B, V // TV),
        in_specs=in_specs,
        out_specs=pl.BlockSpec((1, S, TV), lambda b, v: (b, 0, v)),
        compiler_params=pltpu.CompilerParams(
            dimension_semantics=("parallel", "parallel")),
    )(h_ln_bf16, emb_bf16)


# ------------------------- parameters & full forward ------------------------ #

def init_params(key, num_layers, vocab_size, hidden, max_seq):
    std = 0.02
    keys = jax.random.split(key, 2 + num_layers * 4)
    params = {
        'wte': std * jax.random.normal(keys[0], (vocab_size, hidden), jnp.float32),
        'wpe': std * jax.random.normal(keys[1], (max_seq, hidden), jnp.float32),
        'ln_f_g': jnp.ones((1, hidden), jnp.float32),
        'ln_f_b': jnp.zeros((1, hidden), jnp.float32),
        'layers': [],
    }
    ki = 2
    for _ in range(num_layers):
        wqkv = (std * jax.random.normal(keys[ki], (hidden, 3 * hidden), jnp.float32)
                ).astype(jnp.bfloat16); ki += 1
        wproj = (std * jax.random.normal(keys[ki], (hidden, hidden), jnp.float32)
                 ).astype(jnp.bfloat16); ki += 1
        wfc1 = (std * jax.random.normal(keys[ki], (hidden, 4 * hidden), jnp.float32)
                ).astype(jnp.bfloat16); ki += 1
        wfc2 = (std * jax.random.normal(keys[ki], (4 * hidden, hidden), jnp.float32)
                ).astype(jnp.bfloat16); ki += 1
        params['layers'].append({
            'ln1_g': jnp.ones((1, hidden), jnp.float32),
            'ln1_b': jnp.zeros((1, hidden), jnp.float32),
            'wqkv': wqkv, 'bqkv': jnp.zeros((1, 3 * hidden), jnp.float32),
            'wproj': wproj, 'bproj': jnp.zeros((1, hidden), jnp.float32),
            'ln2_g': jnp.ones((1, hidden), jnp.float32),
            'ln2_b': jnp.zeros((1, hidden), jnp.float32),
            'wfc1': wfc1, 'bfc1': jnp.zeros((1, 4 * hidden), jnp.float32),
            'wfc2': wfc2, 'bfc2': jnp.zeros((1, hidden), jnp.float32),
        })
    return params


def megatron_gpt2_forward(input_ids, params, num_heads):
    B, S = input_ids.shape
    # embedding lookups (gather) kept in plain JAX glue
    words = jnp.take(params['wte'], input_ids, axis=0)                 # (B, S, H)
    pos_ids = jnp.arange(S, dtype=jnp.int32)
    pos = jnp.take(params['wpe'], pos_ids, axis=0)[None, :, :]         # (1, S, H)
    h = (words + pos).astype(jnp.float32)
    # embedding_dropout / attention_dropout / output_dropout: identity (inference)
    for lw in params['layers']:
        h = run_attn_block(h, lw['ln1_g'], lw['ln1_b'], lw['wqkv'], lw['bqkv'],
                           lw['wproj'], lw['bproj'], num_heads)
        h = run_mlp_block(h, lw['ln2_g'], lw['ln2_b'], lw['wfc1'], lw['bfc1'],
                          lw['wfc2'], lw['bfc2'])
    h_ln = run_final_ln(h, params['ln_f_g'], params['ln_f_b'])         # bf16
    logits = run_lm_head(h_ln, params['wte'].astype(jnp.bfloat16))     # fp32 logits
    # TODO(synk): `presents` (per-layer stacked K/V for use_cache=True) are not
    # materialized/returned; only the logits branch of the output is produced.
    return logits


if __name__ == "__main__":
    NUM_LAYERS, VOCAB, HIDDEN, HEADS, MAX_SEQ = 2, 256, 128, 4, 16
    B, S = 2, 8

    key = jax.random.PRNGKey(0)
    pkey, ikey = jax.random.split(key)
    params = init_params(pkey, NUM_LAYERS, VOCAB, HIDDEN, MAX_SEQ)
    input_ids = jax.random.randint(ikey, (B, S), 0, VOCAB, dtype=jnp.int32)

    logits = megatron_gpt2_forward(input_ids, params, HEADS)
    jax.block_until_ready(logits)
    assert logits.shape == (B, S, VOCAB) and logits.dtype == jnp.float32
    assert bool(jnp.all(jnp.isfinite(logits)))
    print("KERNEL_OK")
</pallas_src>

<mosaic_0001>
module attributes {stable_mosaic.version = 11 : i64} {
  func.func @attn_block_kernel(%arg0: i32, %arg1: memref<1x8x128xf32, #tpu.memory_space<vmem>>, %arg2: memref<1x128xf32, #tpu.memory_space<vmem>>, %arg3: memref<1x128xf32, #tpu.memory_space<vmem>>, %arg4: memref<128x384xbf16, #tpu.memory_space<vmem>>, %arg5: memref<1x384xf32, #tpu.memory_space<vmem>>, %arg6: memref<128x128xbf16, #tpu.memory_space<vmem>>, %arg7: memref<1x128xf32, #tpu.memory_space<vmem>>, %arg8: memref<1x8x128xf32, #tpu.memory_space<vmem>>) attributes {dimension_semantics = [#tpu.dimension_semantics<parallel>], iteration_bounds = array<i64: 2>, scalar_prefetch = 0 : i64, scratch_operands = 0 : i64, tpu.core_type = #tpu.core_type<tc>, window_params = [{transform_indices = @transform_0, window_bounds = array<i64: 1, 8, 128>}, {pipeline_mode = #tpu.pipeline_mode<synchronous>, transform_indices = @transform_1, window_bounds = array<i64: 1, 128>}, {pipeline_mode = #tpu.pipeline_mode<synchronous>, transform_indices = @transform_2, window_bounds = array<i64: 1, 128>}, {pipeline_mode = #tpu.pipeline_mode<synchronous>, transform_indices = @transform_3, window_bounds = array<i64: 128, 384>}, {pipeline_mode = #tpu.pipeline_mode<synchronous>, transform_indices = @transform_4, window_bounds = array<i64: 1, 384>}, {pipeline_mode = #tpu.pipeline_mode<synchronous>, transform_indices = @transform_5, window_bounds = array<i64: 128, 128>}, {pipeline_mode = #tpu.pipeline_mode<synchronous>, transform_indices = @transform_6, window_bounds = array<i64: 1, 128>}, {transform_indices = @transform_7, window_bounds = array<i64: 1, 8, 128>}]} {
    %c0 = arith.constant 0 : index
    %c0_0 = arith.constant 0 : index
    %c0_1 = arith.constant 0 : index
    %0 = vector.load %arg1[%c0, %c0_0, %c0_1] : memref<1x8x128xf32, #tpu.memory_space<vmem>>, vector<1x8x128xf32>
    %1 = vector.shape_cast %0 : vector<1x8x128xf32> to vector<8x128xf32>
    %c0_2 = arith.constant 0 : index
    %c0_3 = arith.constant 0 : index
    %2 = vector.load %arg2[%c0_2, %c0_3] : memref<1x128xf32, #tpu.memory_space<vmem>>, vector<1x128xf32>
    %c0_4 = arith.constant 0 : index
    %c0_5 = arith.constant 0 : index
    %3 = vector.load %arg3[%c0_4, %c0_5] : memref<1x128xf32, #tpu.memory_space<vmem>>, vector<1x128xf32>
    %cst = arith.constant dense<0.000000e+00> : vector<8xf32>
    %4 = vector.multi_reduction <add>, %1, %cst [1] : vector<8x128xf32> to vector<8xf32>
    %5 = vector.shape_cast %4 : vector<8xf32> to vector<8x1xf32>
    %cst_6 = arith.constant 1.280000e+02 : f32
    %6 = vector.broadcast %cst_6 : f32 to vector<8x1xf32>
    %7 = arith.divf %5, %6 : vector<8x1xf32>
    %8 = arith.mulf %1, %1 : vector<8x128xf32>
    %cst_7 = arith.constant dense<0.000000e+00> : vector<8xf32>
    %9 = vector.multi_reduction <add>, %8, %cst_7 [1] : vector<8x128xf32> to vector<8xf32>
    %10 = vector.shape_cast %9 : vector<8xf32> to vector<8x1xf32>
    %cst_8 = arith.constant 1.280000e+02 : f32
    %11 = vector.broadcast %cst_8 : f32 to vector<8x1xf32>
    %12 = arith.divf %10, %11 : vector<8x1xf32>
    %13 = arith.mulf %7, %7 : vector<8x1xf32>
    %14 = arith.subf %12, %13 : vector<8x1xf32>
    %15 = vector.broadcast %7 : vector<8x1xf32> to vector<8x128xf32>
    %16 = arith.subf %1, %15 : vector<8x128xf32>
    %cst_9 = arith.constant 9.99999974E-6 : f32
    %17 = vector.broadcast %cst_9 : f32 to vector<8x1xf32>
    %18 = arith.addf %14, %17 : vector<8x1xf32>
    %19 = math.rsqrt %18 : vector<8x1xf32>
    %20 = vector.broadcast %19 : vector<8x1xf32> to vector<8x128xf32>
    %21 = arith.mulf %16, %20 : vector<8x128xf32>
    %22 = vector.broadcast %2 : vector<1x128xf32> to vector<8x128xf32>
    %23 = arith.mulf %21, %22 : vector<8x128xf32>
    %24 = vector.broadcast %3 : vector<1x128xf32> to vector<8x128xf32>
    %25 = arith.addf %23, %24 : vector<8x128xf32>
    %26 = arith.truncf %25 : vector<8x128xf32> to vector<8x128xbf16>
    %c0_10 = arith.constant 0 : index
    %c0_11 = arith.constant 0 : index
    %27 = vector.load %arg4[%c0_10, %c0_11] : memref<128x384xbf16, #tpu.memory_space<vmem>>, vector<128x384xbf16>
    %cst_12 = arith.constant dense<0.000000e+00> : vector<8x384xf32>
    %28 = tpu.matmul %26, %27, %cst_12 {dimension_numbers = #tpu.dot_dimension_numbers<[1], [0], [0], [1], [0, 0, 1, 1], [], []>} : vector<8x128xbf16>, vector<128x384xbf16>, vector<8x384xf32> -> vector<8x384xf32>
    %c0_13 = arith.constant 0 : index
    %c0_14 = arith.constant 0 : index
    %29 = vector.load %arg5[%c0_13, %c0_14] : memref<1x384xf32, #tpu.memory_space<vmem>>, vector<1x384xf32>
    %30 = vector.broadcast %29 : vector<1x384xf32> to vector<8x384xf32>
    %31 = arith.addf %28, %30 : vector<8x384xf32>
    %32 = vector.extract_strided_slice %31 {offsets = [0, 0], sizes = [8, 128], strides = [1, 1]} : vector<8x384xf32> to vector<8x128xf32>
    %33 = vector.shape_cast %32 : vector<8x128xf32> to vector<8x4x32xf32>
    %34 = tpu.transpose %33, [1, 0, 2] : vector<8x4x32xf32> -> vector<4x8x32xf32>
    %35 = vector.extract_strided_slice %31 {offsets = [0, 128], sizes = [8, 128], strides = [1, 1]} : vector<8x384xf32> to vector<8x128xf32>
    %36 = vector.shape_cast %35 : vector<8x128xf32> to vector<8x4x32xf32>
    %37 = tpu.transpose %36, [1, 0, 2] : vector<8x4x32xf32> -> vector<4x8x32xf32>
    %38 = vector.extract_strided_slice %31 {offsets = [0, 256], sizes = [8, 128], strides = [1, 1]} : vector<8x384xf32> to vector<8x128xf32>
    %39 = vector.shape_cast %38 : vector<8x128xf32> to vector<8x4x32xf32>
    %40 = tpu.transpose %39, [1, 0, 2] : vector<8x4x32xf32> -> vector<4x8x32xf32>
    %41 = tpu.iota {dimensions = array<i32: 0>} : vector<8x8xi32>
    %42 = tpu.iota {dimensions = array<i32: 1>} : vector<8x8xi32>
    %43 = arith.cmpi sle, %42, %41 : vector<8x8xi32>
    %44 = arith.truncf %34 : vector<4x8x32xf32> to vector<4x8x32xbf16>
    %45 = arith.truncf %37 : vector<4x8x32xf32> to vector<4x8x32xbf16>
    "tpu.trace_start"() <{level = 10 : i32, message = "nqd,nkd->nqk"}> : () -> ()
    %cst_15 = arith.constant dense<0.000000e+00> : vector<4x8x8xf32>
    %46 = tpu.matmul %44, %45, %cst_15 {dimension_numbers = #tpu.dot_dimension_numbers<[2], [2], [1], [1], [0, 0, 0, 1, 1, 1], [0], [0]>} : vector<4x8x32xbf16>, vector<4x8x32xbf16>, vector<4x8x8xf32> -> vector<4x8x8xf32>
    "tpu.trace_stop"() : () -> ()
    %cst_16 = arith.constant 0.176776692 : f32
    %47 = vector.broadcast %cst_16 : f32 to vector<4x8x8xf32>
    %48 = arith.mulf %46, %47 : vector<4x8x8xf32>
    %49 = vector.shape_cast %43 : vector<8x8xi1> to vector<1x8x8xi1>
    %cst_17 = arith.constant -1.000000e+04 : f32
    %50 = vector.shape_cast %49 : vector<1x8x8xi1> to vector<1x8x8xi1>
    %51 = vector.broadcast %50 : vector<1x8x8xi1> to vector<4x8x8xi1>
    %52 = vector.broadcast %cst_17 : f32 to vector<4x8x8xf32>
    %53 = arith.select %51, %48, %52 : vector<4x8x8xi1>, vector<4x8x8xf32>
    %cst_18 = arith.constant dense<0xFF800000> : vector<4x8xf32>
    %54 = vector.multi_reduction <maximumf>, %53, %cst_18 [2] : vector<4x8x8xf32> to vector<4x8xf32>
    %55 = vector.shape_cast %54 : vector<4x8xf32> to vector<4x8x1xf32>
    %56 = vector.broadcast %55 : vector<4x8x1xf32> to vector<4x8x8xf32>
    %57 = arith.subf %53, %56 : vector<4x8x8xf32>
    %58 = math.exp %57 : vector<4x8x8xf32>
    %cst_19 = arith.constant dense<0.000000e+00> : vector<4x8xf32>
    %59 = vector.multi_reduction <add>, %58, %cst_19 [2] : vector<4x8x8xf32> to vector<4x8xf32>
    %60 = vector.shape_cast %59 : vector<4x8xf32> to vector<4x8x1xf32>
    %61 = tpu.reciprocal %60 {approx = true} : vector<4x8x1xf32> -> vector<4x8x1xf32>
    %62 = vector.broadcast %61 : vector<4x8x1xf32> to vector<4x8x8xf32>
    %63 = arith.mulf %58, %62 : vector<4x8x8xf32>
    %64 = arith.truncf %63 : vector<4x8x8xf32> to vector<4x8x8xbf16>
    %65 = arith.truncf %40 : vector<4x8x32xf32> to vector<4x8x32xbf16>
    "tpu.trace_start"() <{level = 10 : i32, message = "nqk,nkd->nqd"}> : () -> ()
    %cst_20 = arith.constant dense<0.000000e+00> : vector<4x8x32xf32>
    %66 = tpu.matmul %64, %65, %cst_20 {dimension_numbers = #tpu.dot_dimension_numbers<[2], [1], [1], [2], [0, 0, 0, 1, 1, 2], [0], [0]>} : vector<4x8x8xbf16>, vector<4x8x32xbf16>, vector<4x8x32xf32> -> vector<4x8x32xf32>
    "tpu.trace_stop"() : () -> ()
    %67 = tpu.transpose %66, [1, 0, 2] : vector<4x8x32xf32> -> vector<8x4x32xf32>
    %68 = vector.shape_cast %67 : vector<8x4x32xf32> to vector<8x128xf32>
    %69 = arith.truncf %68 : vector<8x128xf32> to vector<8x128xbf16>
    %c0_21 = arith.constant 0 : index
    %c0_22 = arith.constant 0 : index
    %70 = vector.load %arg6[%c0_21, %c0_22] : memref<128x128xbf16, #tpu.memory_space<vmem>>, vector<128x128xbf16>
    %cst_23 = arith.constant dense<0.000000e+00> : vector<8x128xf32>
    %71 = tpu.matmul %69, %70, %cst_23 {dimension_numbers = #tpu.dot_dimension_numbers<[1], [0], [0], [1], [0, 0, 1, 1], [], []>} : vector<8x128xbf16>, vector<128x128xbf16>, vector<8x128xf32> -> vector<8x128xf32>
    %c0_24 = arith.constant 0 : index
    %c0_25 = arith.constant 0 : index
    %72 = vector.load %arg7[%c0_24, %c0_25] : memref<1x128xf32, #tpu.memory_space<vmem>>, vector<1x128xf32>
    %73 = vector.broadcast %72 : vector<1x128xf32> to vector<8x128xf32>
    %74 = arith.addf %71, %73 : vector<8x128xf32>
    %75 = arith.addf %1, %74 : vector<8x128xf32>
    %c0_26 = arith.constant 0 : index
    %c0_27 = arith.constant 0 : index
    %c0_28 = arith.constant 0 : index
    %76 = vector.load %arg8[%c0_26, %c0_27, %c0_28] : memref<1x8x128xf32, #tpu.memory_space<vmem>>, vector<1x8x128xf32>
    %77 = vector.shape_cast %76 : vector<1x8x128xf32> to vector<8x128xf32>
    %78 = vector.shape_cast %75 : vector<8x128xf32> to vector<1x8x128xf32>
    tpu.vector_store %arg8[%c0_26, %c0_27, %c0_28], %78 {strides = array<i32>} : memref<1x8x128xf32, #tpu.memory_space<vmem>>, vector<1x8x128xf32>,
    return
  }
  func.func @transform_0(%arg0: i32) -> (i32, i32, i32) {
    %c0_i32 = arith.constant 0 : i32
    %c0_i32_0 = arith.constant 0 : i32
    %c0_i32_1 = arith.constant 0 : i32
    return %arg0, %c0_i32, %c0_i32_0 : i32, i32, i32
  }
  func.func @transform_1(%arg0: i32) -> (i32, i32) {
    %c0_i32 = arith.constant 0 : i32
    %c0_i32_0 = arith.constant 0 : i32
    %c0_i32_1 = arith.constant 0 : i32
    return %c0_i32, %c0_i32_0 : i32, i32
  }
  func.func @transform_2(%arg0: i32) -> (i32, i32) {
    %c0_i32 = arith.constant 0 : i32
    %c0_i32_0 = arith.constant 0 : i32
    %c0_i32_1 = arith.constant 0 : i32
    return %c0_i32, %c0_i32_0 : i32, i32
  }
  func.func @transform_3(%arg0: i32) -> (i32, i32) {
    %c0_i32 = arith.constant 0 : i32
    %c0_i32_0 = arith.constant 0 : i32
    %c0_i32_1 = arith.constant 0 : i32
    return %c0_i32, %c0_i32_0 : i32, i32
  }
  func.func @transform_4(%arg0: i32) -> (i32, i32) {
    %c0_i32 = arith.constant 0 : i32
    %c0_i32_0 = arith.constant 0 : i32
    %c0_i32_1 = arith.constant 0 : i32
    return %c0_i32, %c0_i32_0 : i32, i32
  }
  func.func @transform_5(%arg0: i32) -> (i32, i32) {
    %c0_i32 = arith.constant 0 : i32
    %c0_i32_0 = arith.constant 0 : i32
    %c0_i32_1 = arith.constant 0 : i32
    return %c0_i32, %c0_i32_0 : i32, i32
  }
  func.func @transform_6(%arg0: i32) -> (i32, i32) {
    %c0_i32 = arith.constant 0 : i32
    %c0_i32_0 = arith.constant 0 : i32
    %c0_i32_1 = arith.constant 0 : i32
    return %c0_i32, %c0_i32_0 : i32, i32
  }
  func.func @transform_7(%arg0: i32) -> (i32, i32, i32) {
    %c0_i32 = arith.constant 0 : i32
    %c0_i32_0 = arith.constant 0 : i32
    %c0_i32_1 = arith.constant 0 : i32
    return %arg0, %c0_i32, %c0_i32_0 : i32, i32, i32
  }
}

</mosaic_0001>

<llo_original>
// kernel: tpu_custom_call.1
$region0: #{tpu_custom_call.1}
  #allocation0 [shape = 'u32[]', space=smem, size = 0x4, offset = 0x4, fixed_abs, tag = 'smem constant byte address 0x4 - core index']
  #allocation1 [shape = 'u32[144,128]{1,0:T(1,128)}', space=vmem, size = 0x12000, scoped, tag = 'internal scratch']
  %s0 = inlined_call_operand.hbm [shape: f32[2,8,128], index: 0, kind: input, shape index: {}]
  %s1 = inlined_call_operand.vmem [shape: f32[1,128], index: 1, kind: input, shape index: {}]
  %s2 = inlined_call_operand.vmem [shape: f32[1,128], index: 2, kind: input, shape index: {}]
  %s3 = inlined_call_operand.hbm [shape: bf16[128,384], index: 3, kind: input, shape index: {}]
  %s4 = inlined_call_operand.vmem [shape: f32[1,384], index: 4, kind: input, shape index: {}]
  %s5 = inlined_call_operand.hbm [shape: bf16[128,128], index: 5, kind: input, shape index: {}]
  %s6 = inlined_call_operand.vmem [shape: f32[1,128], index: 6, kind: input, shape index: {}]
  %s7 = inlined_call_operand.hbm [shape: f32[2,8,128], index: 7, kind: output, shape index: {}]
  %s8 = sld [smem:[#allocation0]]
  $region73: #{tpu_custom_call.1} parent=0
    _
  %s10 = ssub.s32 1, %s8
  %s11 = scalar_select 0, %s10, %s8
  $region1: #{tpu_custom_call.1} parent=0
    #allocation2 [shape = 'u8[8192]{0}', space=vmem, size = 0x2000, scoped, tag = 'input window, operand 0']
    #allocation3 [shape = 's32[2]{0}', space=sflag, size = 0x8, scoped, tag = 'scoped memory for tpu_custom_call.1']
    #allocation4 [shape = 's32[2]{0}', space=sflag, size = 0x8, scoped, tag = 'scoped memory for tpu_custom_call.1']
    #allocation5 [shape = 'u8[98304]{0}', space=vmem, size = 0x18000, scoped, tag = 'input window, operand 3, single buffered']
    #allocation6 [shape = 's32[1]{0}', space=sflag, size = 0x4, scoped, tag = 'scoped memory for tpu_custom_call.1']
    #allocation7 [shape = 'u8[32768]{0}', space=vmem, size = 0x8000, scoped, tag = 'input window, operand 5, single buffered']
    #allocation8 [shape = 'u8[8192]{0}', space=vmem, size = 0x2000, scoped, tag = 'output window, operand 0']
    %12 = vsyncpa [#allocation3], 0
    %s13 = scalar_lea.sflag [#allocation3], 1
    %14 = vsyncpa %s13, 0
    %15 = vsyncpa [#allocation6], 0
    %16 = vsyncpa [#allocation4], 0
    %s17 = scalar_lea.sflag [#allocation4], 1
    %18 = vsyncpa %s17, 0
    loop: start=0, step=1, limit=4
    $region2: #{tpu_custom_call.1} parent=1 // loop_pre_header
      _
    $region3: #{tpu_custom_call.1} parent=1 // loop_header
      %s20 = sphi 0, %s24
      %p21 = scmp.ge.s32.totalorder %s20, 4
      %s30 = sphi 0, %s32
      %s33 = sphi 0, %s30
      %s34 = sphi 0, %s33
      %s50 = sphi 0, %s34
      %s54 = sphi 0, %s54
      %s56 = sphi 0, %s54
      %s57 = sphi 0, %s56
      %s71 = sphi 0, %s57
      %s75 = sphi 0, %s75
      %s77 = sphi 0, %s75
      %s78 = sphi 0, %s77
      %s92 = sphi 0, %s78
      %s96 = sphi 0, %s96
      %s98 = sphi 0, %s96
      %s99 = sphi 0, %s98
      %s113 = sphi 0, %s99
      %s117 = sphi 0, %s117
      %s119 = sphi 0, %s117
      %s120 = sphi 0, %s119
      %s134 = sphi 0, %s120
      %s138 = sphi 0, %s138
      %s140 = sphi 0, %s138
      %s141 = sphi 0, %s140
      %s155 = sphi 0, %s141
      %s159 = sphi 0, %s159
      %s161 = sphi 0, %s159
      %s162 = sphi 0, %s161
      %s176 = sphi 0, %s162
      %s182 = sphi 0, %s184
      %s185 = sphi 0, %s182
      %s186 = sphi 0, %s185
      %s202 = sphi 0, %s186
    $region4: #{tpu_custom_call.1} parent=1 // loop_header_branch
      %23 = sbr.rel (%p21) target = $region8
    $region5: #{tpu_custom_call.1} parent=1 // loop_body
      %s25 = ssub.s32 %s20, 1
      %s26 = ssub.s32 %s20, 2
      %s27 = sadd.s32 %s20, 1
      %s28 = ssub.s32 %s20, %s27
      %p29 = scmp.eq.s32.totalorder %s28, 0
      %s31 = sadd.s32 %s30, 1
      %s32 = scalar_select %p29, %s30, %s31
      %p35 = pneg %p29
      %p36 = scmp.eq.s32.totalorder %s20, 1
      %p37 = por %p35, %p36
      %p38 = scmp.ne.s32.totalorder %s30, %s33
      %p39 = scmp.eq.s32.totalorder %s20, 0
      %p40 = por %p38, %p39
      %p41 = scmp.ne.s32.totalorder %s30, %s33
      %p42 = scmp.eq.s32.totalorder %s25, 1
      %p43 = por %p41, %p42
      %p44 = scmp.ne.s32.totalorder %s33, %s34
      %p45 = scmp.eq.s32.totalorder %s25, 0
      %p46 = por %p44, %p45
      %p47 = scmp.ne.s32.totalorder %s33, %s34
      %p48 = scmp.eq.s32.totalorder %s26, 1
      %p49 = por %p47, %p48
      %p51 = scmp.ne.s32.totalorder %s34, %s50
      %p52 = scmp.eq.s32.totalorder %s26, 0
      %p53 = por %p51, %p52
      %s55 = sadd.s32 %s54, 1
      %p58 = scmp.eq.s32.totalorder %s20, 1
      %p59 = scmp.ne.s32.totalorder %s54, %s56
      %p60 = scmp.eq.s32.totalorder %s20, 0
      %p61 = por %p59, %p60
      %p62 = scmp.ne.s32.totalorder %s54, %s56
      %p63 = scmp.eq.s32.totalorder %s25, 1
      %p64 = por %p62, %p63
      %p65 = scmp.ne.s32.totalorder %s56, %s57
      %p66 = scmp.eq.s32.totalorder %s25, 0
      %p67 = por %p65, %p66
      %p68 = scmp.ne.s32.totalorder %s56, %s57
      %p69 = scmp.eq.s32.totalorder %s26, 1
      %p70 = por %p68, %p69
      %p72 = scmp.ne.s32.totalorder %s57, %s71
      %p73 = scmp.eq.s32.totalorder %s26, 0
      %p74 = por %p72, %p73
      %s76 = sadd.s32 %s75, 1
      %p79 = scmp.eq.s32.totalorder %s20, 1
      %p80 = scmp.ne.s32.totalorder %s75, %s77
      %p81 = scmp.eq.s32.totalorder %s20, 0
      %p82 = por %p80, %p81
      %p83 = scmp.ne.s32.totalorder %s75, %s77
      %p84 = scmp.eq.s32.totalorder %s25, 1
      %p85 = por %p83, %p84
      %p86 = scmp.ne.s32.totalorder %s77, %s78
      %p87 = scmp.eq.s32.totalorder %s25, 0
      %p88 = por %p86, %p87
      %p89 = scmp.ne.s32.totalorder %s77, %s78
      %p90 = scmp.eq.s32.totalorder %s26, 1
      %p91 = por %p89, %p90
      %p93 = scmp.ne.s32.totalorder %s78, %s92
      %p94 = scmp.eq.s32.totalorder %s26, 0
      %p95 = por %p93, %p94
      %s97 = sadd.s32 %s96, 1
      %p100 = scmp.eq.s32.totalorder %s20, 1
      %p101 = scmp.ne.s32.totalorder %s96, %s98
      %p102 = scmp.eq.s32.totalorder %s20, 0
      %p103 = por %p101, %p102
      %p104 = scmp.ne.s32.totalorder %s96, %s98
      %p105 = scmp.eq.s32.totalorder %s25, 1
      %p106 = por %p104, %p105
      %p107 = scmp.ne.s32.totalorder %s98, %s99
      %p108 = scmp.eq.s32.totalorder %s25, 0
      %p109 = por %p107, %p108
      %p110 = scmp.ne.s32.totalorder %s98, %s99
      %p111 = scmp.eq.s32.totalorder %s26, 1
      %p112 = por %p110, %p111
      %p114 = scmp.ne.s32.totalorder %s99, %s113
      %p115 = scmp.eq.s32.totalorder %s26, 0
      %p116 = por %p114, %p115
      %s118 = sadd.s32 %s117, 1
      %p121 = scmp.eq.s32.totalorder %s20, 1
      %p122 = scmp.ne.s32.totalorder %s117, %s119
      %p123 = scmp.eq.s32.totalorder %s20, 0
      %p124 = por %p122, %p123
      %p125 = scmp.ne.s32.totalorder %s117, %s119
      %p126 = scmp.eq.s32.totalorder %s25, 1
      %p127 = por %p125, %p126
      %p128 = scmp.ne.s32.totalorder %s119, %s120
      %p129 = scmp.eq.s32.totalorder %s25, 0
      %p130 = por %p128, %p129
      %p131 = scmp.ne.s32.totalorder %s119, %s120
      %p132 = scmp.eq.s32.totalorder %s26, 1
      %p133 = por %p131, %p132
      %p135 = scmp.ne.s32.totalorder %s120, %s134
      %p136 = scmp.eq.s32.totalorder %s26, 0
      %p137 = por %p135, %p136
      %s139 = sadd.s32 %s138, 1
      %p142 = scmp.eq.s32.totalorder %s20, 1
      %p143 = scmp.ne.s32.totalorder %s138, %s140
      %p144 = scmp.eq.s32.totalorder %s20, 0
      %p145 = por %p143, %p144
      %p146 = scmp.ne.s32.totalorder %s138, %s140
      %p147 = scmp.eq.s32.totalorder %s25, 1
      %p148 = por %p146, %p147
      %p149 = scmp.ne.s32.totalorder %s140, %s141
      %p150 = scmp.eq.s32.totalorder %s25, 0
      %p151 = por %p149, %p150
      %p152 = scmp.ne.s32.totalorder %s140, %s141
      %p153 = scmp.eq.s32.totalorder %s26, 1
      %p154 = por %p152, %p153
      %p156 = scmp.ne.s32.totalorder %s141, %s155
      %p157 = scmp.eq.s32.totalorder %s26, 0
      %p158 = por %p156, %p157
      %s160 = sadd.s32 %s159, 1
      %p163 = scmp.eq.s32.totalorder %s20, 1
      %p164 = scmp.ne.s32.totalorder %s159, %s161
      %p165 = scmp.eq.s32.totalorder %s20, 0
      %p166 = por %p164, %p165
      %p167 = scmp.ne.s32.totalorder %s159, %s161
      %p168 = scmp.eq.s32.totalorder %s25, 1
      %p169 = por %p167, %p168
      %p170 = scmp.ne.s32.totalorder %s161, %s162
      %p171 = scmp.eq.s32.totalorder %s25, 0
      %p172 = por %p170, %p171
      %p173 = scmp.ne.s32.totalorder %s161, %s162
      %p174 = scmp.eq.s32.totalorder %s26, 1
      %p175 = por %p173, %p174
      %p177 = scmp.ne.s32.totalorder %s162, %s176
      %p178 = scmp.eq.s32.totalorder %s26, 0
      %p179 = por %p177, %p178
      %s180 = ssub.s32 %s20, %s27
      %p181 = scmp.eq.s32.totalorder %s180, 0
      %s183 = sadd.s32 %s182, 1
      %s184 = scalar_select %p181, %s182, %s183
      %p187 = pneg %p181
      %p188 = scmp.eq.s32.totalorder %s20, 1
      %p189 = por %p187, %p188
      %p190 = scmp.ne.s32.totalorder %s182, %s185
      %p191 = scmp.eq.s32.totalorder %s20, 0
      %p192 = por %p190, %p191
      %p193 = scmp.ne.s32.totalorder %s182, %s185
      %p194 = scmp.eq.s32.totalorder %s25, 1
      %p195 = por %p193, %p194
      %p196 = scmp.ne.s32.totalorder %s185, %s186
      %p197 = scmp.eq.s32.totalorder %s25, 0
      %p198 = por %p196, %p197
      %p199 = scmp.ne.s32.totalorder %s185, %s186
      %p200 = scmp.eq.s32.totalorder %s26, 1
      %p201 = por %p199, %p200
      %p203 = scmp.ne.s32.totalorder %s186, %s202
      %p204 = scmp.eq.s32.totalorder %s26, 0
      %p205 = por %p203, %p204
      %p206 = scmp.le.s32.totalorder 1, %s20
      %p207 = scmp.lt.s32.totalorder %s20, 3
      %p208 = pnand %p206, %p207
      %p209 = pneg %p208
      // Predicated region
      $region9: #{tpu_custom_call.1} parent=5 // pred_check
        _
      $region10: #{tpu_custom_call.1} parent=5 // pred_check_branch
        %211 = sbr.rel (%p208) target = $region12
      $region11: #{tpu_custom_call.1} parent=5 // pred_region
        %s212 = ssub.s32 %s20, 1
        // Predicated region
        $region13: #{tpu_custom_call.1} parent=11 // pred_check
          %p213 = pneg %p67
        $region14: #{tpu_custom_call.1} parent=11 // pred_check_branch
          %215 = sbr.rel (%p213) target = $region16
        $region15: #{tpu_custom_call.1} parent=11 // pred_region
          _
        $region16: #{tpu_custom_call.1} parent=11 // pred_fallthru
          _
        // Predicated region
        $region17: #{tpu_custom_call.1} parent=11 // pred_check
          %p216 = pneg %p88
        $region18: #{tpu_custom_call.1} parent=11 // pred_check_branch
          %218 = sbr.rel (%p216) target = $region20
        $region19: #{tpu_custom_call.1} parent=11 // pred_region
          _
        $region20: #{tpu_custom_call.1} parent=11 // pred_fallthru
          _
        // Predicated region
        $region21: #{tpu_custom_call.1} parent=11 // pred_check
          %p219 = pneg %p109
        $region22: #{tpu_custom_call.1} parent=11 // pred_check_branch
          %221 = sbr.rel (%p219) target = $region24
        $region23: #{tpu_custom_call.1} parent=11 // pred_region
          %s223 = ssub.s32 3072, 3072
          %224 = vsyncadd [#allocation6], %s223
          %s225 = sshll.u32 [#allocation5], 4
          %s226 = int_to_ptr.vmem [resolvable:$true] %s225
          %231 = dma.hbm_to_vmem [thread:$0]  %s3, 3072, %s226, [#allocation6], 192, 192, 12
        $region24: #{tpu_custom_call.1} parent=11 // pred_fallthru
          _
        // Predicated region
        $region25: #{tpu_custom_call.1} parent=11 // pred_check
          %p232 = pneg %p130
        $region26: #{tpu_custom_call.1} parent=11 // pred_check_branch
          %234 = sbr.rel (%p232) target = $region28
        $region27: #{tpu_custom_call.1} parent=11 // pred_region
          _
        $region28: #{tpu_custom_call.1} parent=11 // pred_fallthru
          _
        // Predicated region
        $region29: #{tpu_custom_call.1} parent=11 // pred_check
          %p235 = pneg %p151
        $region30: #{tpu_custom_call.1} parent=11 // pred_check_branch
          %237 = sbr.rel (%p235) target = $region32
        $region31: #{tpu_custom_call.1} parent=11 // pred_region
          %s239 = ssub.s32 1024, 1024
          %240 = vsyncadd [#allocation6], %s239
          %s241 = sshll.u32 [#allocation7], 4
          %s242 = int_to_ptr.vmem [resolvable:$true] %s241
          %247 = dma.hbm_to_vmem [thread:$0]  %s5, 1024, %s242, [#allocation6], 64, 64, 4
        $region32: #{tpu_custom_call.1} parent=11 // pred_fallthru
          _
        // Predicated region
        $region33: #{tpu_custom_call.1} parent=11 // pred_check
          %p248 = pneg %p172
        $region34: #{tpu_custom_call.1} parent=11 // pred_check_branch
          %250 = sbr.rel (%p248) target = $region36
        $region35: #{tpu_custom_call.1} parent=11 // pred_region
          _
        $region36: #{tpu_custom_call.1} parent=11 // pred_fallthru
          _
      $region12: #{tpu_custom_call.1} parent=5 // pred_fallthru
        _
      %p251 = scmp.lt.s32.totalorder %s20, 2
      // Predicated region
      $region37: #{tpu_custom_call.1} parent=5 // pred_check
        %p252 = pneg %p251
      $region38: #{tpu_custom_call.1} parent=5 // pred_check_branch
        %254 = sbr.rel (%p252) target = $region40
      $region39: #{tpu_custom_call.1} parent=5 // pred_region
        // Predicated region
        $region41: #{tpu_custom_call.1} parent=39 // pred_check
          %p255 = pneg %p40
        $region42: #{tpu_custom_call.1} parent=39 // pred_check_branch
          %257 = sbr.rel (%p255) target = $region44
        $region43: #{tpu_custom_call.1} parent=39 // pred_region
          %s258 = sand.u32 %s30, 1
          %s259 = scalar_lea.sflag [#allocation3], %s258
          %s260 = sand.u32 %s30, 1
          %s261 = smul.addr %s260, 8
          %s262 = scalar_lea.vmem [#allocation2], %s261
          %s264 = ssub.s32 128, 128
          %265 = vsyncadd %s259, %s264
          %s266 = smul.addr %s20, 128
          %s267 = scalar_lea.hbm %s0, %s266
          %s269 = sshll.u32 %s262, 4
          %s270 = int_to_ptr.vmem [resolvable:$true] %s269
          %272 = dma.hbm_to_vmem [thread:$0]  %s267, 128, %s270, %s259
        $region44: #{tpu_custom_call.1} parent=39 // pred_fallthru
          _
      $region40: #{tpu_custom_call.1} parent=5 // pred_fallthru
        _
      %p273 = scmp.le.s32.totalorder 1, %s20
      %p274 = scmp.lt.s32.totalorder %s20, 3
      %p275 = pnand %p273, %p274
      %p276 = pneg %p275
      // Predicated region
      $region45: #{tpu_custom_call.1} parent=5 // pred_check
        _
      $region46: #{tpu_custom_call.1} parent=5 // pred_check_branch
        %278 = sbr.rel (%p275) target = $region48
      $region47: #{tpu_custom_call.1} parent=5 // pred_region
        %s279 = ssub.s32 %s20, 1
        %s280 = sand.u32 %s33, 1
        %s281 = scalar_lea.sflag [#allocation3], %s280
        %s282 = sand.u32 %s33, 1
        %s283 = smul.addr %s282, 8
        %s284 = scalar_lea.vmem [#allocation2], %s283
        // Predicated region
        $region49: #{tpu_custom_call.1} parent=47 // pred_check
          %p285 = pneg %p46
        $region50: #{tpu_custom_call.1} parent=47 // pred_check_branch
          %287 = sbr.rel (%p285) target = $region52
        $region51: #{tpu_custom_call.1} parent=47 // pred_region
          %288 = dma.done %s281, 128
        $region52: #{tpu_custom_call.1} parent=47 // pred_fallthru
          _
        // Predicated region
        $region53: #{tpu_custom_call.1} parent=47 // pred_check
          %p289 = pneg %p109
        $region54: #{tpu_custom_call.1} parent=47 // pred_check_branch
          %291 = sbr.rel (%p289) target = $region56
        $region55: #{tpu_custom_call.1} parent=47 // pred_region
          %292 = dma.done [#allocation6], 3072
        $region56: #{tpu_custom_call.1} parent=47 // pred_fallthru
          _
        // Predicated region
        $region57: #{tpu_custom_call.1} parent=47 // pred_check
          %p293 = pneg %p151
        $region58: #{tpu_custom_call.1} parent=47 // pred_check_branch
          %295 = sbr.rel (%p293) target = $region60
        $region59: #{tpu_custom_call.1} parent=47 // pred_region
          %296 = dma.done [#allocation6], 1024
        $region60: #{tpu_custom_call.1} parent=47 // pred_fallthru
          _
        %s297 = sand.u32 %s33, 1
        %s298 = scalar_lea.sflag [#allocation3], %s297
        %s299 = sand.u32 %s33, 1
        %s300 = smul.addr %s299, 8
        %s301 = scalar_lea.vmem [#allocation2], %s300
        %p302 = pneg %p46
        %p303 = pneg %p43
        %p304 = pneg %p67
        %p305 = pneg %p64
        %p306 = pneg %p88
        %p307 = pneg %p85
        %p308 = pneg %p109
        %p309 = pneg %p106
        %p310 = pneg %p130
        %p311 = pneg %p127
        %p312 = pneg %p151
        %p313 = pneg %p148
        %p314 = pneg %p172
        %p315 = pneg %p169
        %p316 = pneg %p198
        %p317 = pneg %p195
        %s318 = sand.u32 %s185, 1
        %s319 = scalar_lea.sflag [#allocation4], %s318
        %s320 = sand.u32 %s185, 1
        %s321 = smul.addr %s320, 8
        %s322 = scalar_lea.vmem [#allocation8], %s321
        %v324 = vld [vmem:[%s284] sm:$0xff]
        %v325 = vld [vmem:[%s1] sm:$0x1]
        %v326 = vld [vmem:[%s2] sm:$0x1]
        %327 = vadd.xlane.f32.xlu0 %v324
        %v328 = vpop.xlane.xlu0 %327
        %v329 = vrcp.pop 128.0
        %v330 = vmul.f32 %v328, %v329
        %v331 = vmul.f32 %v324, %v324
        %332 = vadd.xlane.f32.xlu0 %v331
        %v333 = vpop.xlane.xlu0 %332
        %v334 = vmul.f32 %v333, %v329
        %v335 = vmul.f32 %v330, %v330
        %v336 = vsub.f32 %v334, %v335
        %v337 = vsub.f32 %v324, %v330
        %v338 = vadd.f32 %v336, 1e-05
        %v339 = vrsqrt.pop %v338
        %v340 = vmul.f32 %v337, %v339
        %v342 = vlaneseq
        %v343 = vshrl.u32 %v342, 7
        %v344 = vsub.s32 0, %v343
        %v345 = vrot.slane %v325, %v344
        %v347 = vmul.f32 %v340, %v345
        %v349 = vlaneseq
        %v350 = vshrl.u32 %v349, 7
        %v351 = vsub.s32 0, %v350
        %v352 = vrot.slane %v326, %v351
        %v354 = vadd.f32 %v347, %v352
        %v355 = vpack.c.bf16 %v354, %v354
        %v356 = vld [vmem:[#allocation5] sm:$0xff]
        %v357 = vld [vmem:[#allocation5 + $0x8] sm:$0xf]
        %v358 = vld [vmem:[#allocation5 + $0xc] sm:$0xff]
        %v359 = vld [vmem:[#allocation5 + $0x14] sm:$0xf]
        %v360 = vld [vmem:[#allocation5 + $0x18] sm:$0xff]
        %v361 = vld [vmem:[#allocation5 + $0x20] sm:$0xf]
        %v362 = vld [vmem:[#allocation5 + $0x24] sm:$0xff]
        %v363 = vld [vmem:[#allocation5 + $0x2c] sm:$0xf]
        %v364 = vld [vmem:[#allocation5 + $0x30] sm:$0xff]
        %v365 = vld [vmem:[#allocation5 + $0x38] sm:$0xf]
        %v366 = vld [vmem:[#allocation5 + $0x3c] sm:$0xff]
        %v367 = vld [vmem:[#allocation5 + $0x44] sm:$0xf]
        %v368 = vld [vmem:[#allocation5 + $0x48] sm:$0xff]
        %v369 = vld [vmem:[#allocation5 + $0x50] sm:$0xf]
        %v370 = vld [vmem:[#allocation5 + $0x54] sm:$0xff]
        %v371 = vld [vmem:[#allocation5 + $0x5c] sm:$0xf]
        %v372 = vld [vmem:[#allocation5 + $0x60] sm:$0xff]
        %v373 = vld [vmem:[#allocation5 + $0x68] sm:$0xf]
        %v374 = vld [vmem:[#allocation5 + $0x6c] sm:$0xff]
        %v375 = vld [vmem:[#allocation5 + $0x74] sm:$0xf]
        %v376 = vld [vmem:[#allocation5 + $0x78] sm:$0xff]
        %v377 = vld [vmem:[#allocation5 + $0x80] sm:$0xf]
        %v378 = vld [vmem:[#allocation5 + $0x84] sm:$0xff]
        %v379 = vld [vmem:[#allocation5 + $0x8c] sm:$0xf]
        %v380 = vld [vmem:[#allocation5 + $0x90] sm:$0xff]
        %v381 = vld [vmem:[#allocation5 + $0x98] sm:$0xf]
        %v382 = vld [vmem:[#allocation5 + $0x9c] sm:$0xff]
        %v383 = vld [vmem:[#allocation5 + $0xa4] sm:$0xf]
        %v384 = vld [vmem:[#allocation5 + $0xa8] sm:$0xff]
        %v385 = vld [vmem:[#allocation5 + $0xb0] sm:$0xf]
        %v386 = vld [vmem:[#allocation5 + $0xb4] sm:$0xff]
        %v387 = vld [vmem:[#allocation5 + $0xbc] sm:$0xf]
        %v388 = vld [vmem:[%s4] sm:$0x7]
        %v390 = vlaneseq
        %v391 = vshrl.u32 %v390, 7
        %v392 = vsub.s32 0, %v391
        %v393 = vrot.slane %v388, %v392
        %v394 = vlaneseq
        %v395 = vshrl.u32 %v394, 7
        %v396 = vsub.s32 1, %v395
        %v397 = vrot.slane %v388, %v396
        %v398 = vlaneseq
        %v399 = vshrl.u32 %v398, 7
        %v400 = vsub.s32 2, %v399
        %v401 = vrot.slane %v388, %v400
        %v437 = vunpack.c.l.b16 %v356
        %v438 = vunpack.c.h.b16 %v356
        %v439 = vunpack.c.l.b16 %v357
        %v440 = vunpack.c.l.b16 %v358
        %v441 = vunpack.c.h.b16 %v358
        %v442 = vunpack.c.l.b16 %v359
        %v443 = vunpack.c.l.b16 %v360
        %v444 = vunpack.c.h.b16 %v360
        %v445 = vunpack.c.l.b16 %v361
        %v446 = vunpack.c.l.b16 %v362
        %v447 = vunpack.c.h.b16 %v362
        %v448 = vunpack.c.l.b16 %v363
        %v449 = vunpack.c.l.b16 %v364
        %v450 = vunpack.c.h.b16 %v364
        %v451 = vunpack.c.l.b16 %v365
        %v452 = vunpack.c.l.b16 %v366
        %v453 = vunpack.c.h.b16 %v366
        %v454 = vunpack.c.l.b16 %v367
        %v455 = vunpack.c.l.b16 %v368
        %v456 = vunpack.c.h.b16 %v368
        %v457 = vunpack.c.l.b16 %v369
        %v458 = vunpack.c.l.b16 %v370
        %v459 = vunpack.c.h.b16 %v370
        %v460 = vunpack.c.l.b16 %v371
        %v461 = vunpack.c.l.b16 %v372
        %v462 = vunpack.c.h.b16 %v372
        %v463 = vunpack.c.l.b16 %v373
        %v464 = vunpack.c.l.b16 %v374
        %v465 = vunpack.c.h.b16 %v374
        %v466 = vunpack.c.l.b16 %v375
        %v467 = vunpack.c.l.b16 %v376
        %v468 = vunpack.c.h.b16 %v376
        %v469 = vunpack.c.l.b16 %v377
        %v470 = vunpack.c.l.b16 %v378
        %v471 = vunpack.c.h.b16 %v378
        %v472 = vunpack.c.l.b16 %v379
        %v473 = vunpack.c.l.b16 %v380
        %v474 = vunpack.c.h.b16 %v380
        %v475 = vunpack.c.l.b16 %v381
        %v476 = vunpack.c.l.b16 %v382
        %v477 = vunpack.c.h.b16 %v382
        %v478 = vunpack.c.l.b16 %v383
        %v479 = vunpack.c.l.b16 %v384
        %v480 = vunpack.c.h.b16 %v384
        %v481 = vunpack.c.l.b16 %v385
        %v482 = vunpack.c.l.b16 %v386
        %v483 = vunpack.c.h.b16 %v386
        %v484 = vunpack.c.l.b16 %v387
        %v485 = vpack.c.b16 %v440, %v437
        %v486 = vpack.c.b16 %v441, %v438
        %v487 = vpack.c.b16 %v442, %v439
        %v488 = vpack.c.b16 %v446, %v443
        %v489 = vpack.c.b16 %v447, %v444
        %v490 = vpack.c.b16 %v448, %v445
        %v491 = vpack.c.b16 %v452, %v449
        %v492 = vpack.c.b16 %v453, %v450
        %v493 = vpack.c.b16 %v454, %v451
        %v494 = vpack.c.b16 %v458, %v455
        %v495 = vpack.c.b16 %v459, %v456
        %v496 = vpack.c.b16 %v460, %v457
        %v497 = vpack.c.b16 %v464, %v461
        %v498 = vpack.c.b16 %v465, %v462
        %v499 = vpack.c.b16 %v466, %v463
        %v500 = vpack.c.b16 %v470, %v467
        %v501 = vpack.c.b16 %v471, %v468
        %v502 = vpack.c.b16 %v472, %v469
        %v503 = vpack.c.b16 %v476, %v473
        %v504 = vpack.c.b16 %v477, %v474
        %v505 = vpack.c.b16 %v478, %v475
        %v506 = vpack.c.b16 %v482, %v479
        %v507 = vpack.c.b16 %v483, %v480
        %v508 = vpack.c.b16 %v484, %v481
        %533 = vmatprep.subr.bf16.mxu0 %v486
        %534 = vmatpush1.bf16.msra.mxu0 %v485
        %535 = vmatprep.subr.bf16.mxu0 %v489
        %536 = vmatpush1.bf16.msra.mxu0 %v488
        %537 = vmatprep.subr.bf16.mxu0 %v492
        %538 = vmatpush1.bf16.msra.mxu0 %v491
        %539 = vmatprep.subr.bf16.mxu0 %v495
        %540 = vmatpush1.bf16.msra.mxu0 %v494
        %541 = vmatprep.subr.bf16.mxu0 %v498
        %542 = vmatpush1.bf16.msra.mxu0 %v497
        %543 = vmatprep.subr.bf16.mxu0 %v501
        %544 = vmatpush1.bf16.msra.mxu0 %v500
        %545 = vmatprep.subr.bf16.mxu0 %v504
        %546 = vmatpush1.bf16.msra.mxu0 %v503
        %547 = vmatprep.subr.bf16.mxu0 %v507
        %548 = vmatpush1.bf16.msra.mxu0 %v506
        %549 = vmatprep.subr.bf16.mxu0 0
        %550 = vmatpush1.bf16.msra.mxu0 0
        %551 = vmatprep.subr.bf16.mxu0 0
        %552 = vmatpush1.bf16.msra.mxu0 0
        %553 = vmatprep.subr.bf16.mxu0 0
        %554 = vmatpush1.bf16.msra.mxu0 0
        %555 = vmatprep.subr.bf16.mxu0 0
        %556 = vmatpush1.bf16.msra.mxu0 0
        %557 = vmatprep.subr.bf16.mxu0 0
        %558 = vmatpush1.bf16.msra.mxu0 0
        %559 = vmatprep.subr.bf16.mxu0 0
        %560 = vmatpush1.bf16.msra.mxu0 0
        %561 = vmatprep.subr.bf16.mxu0 0
        %562 = vmatpush1.bf16.msra.mxu0 0
        %563 = vmatprep.subr.bf16.mxu0 0
        %564 = vmatpush1.bf16.msra.mxu0 0
        %565 = vmatprep.mubr.bf16.mxu0 0
        %566 = vmatmul.mubr.bf16.gmra.mrb[0].mxu0 %v355
        %v567 = vpop.f32.mrb[0].mxu0
        %v568 = vadd.f32 %v393, %v567
        %v569 = vpop.f32.mrb[0].mxu0
        %v570 = vadd.f32 %v397, %v569
        %v571 = vpop.f32.mrb[0].mxu0
        %v572 = vpop.f32.mrb[0].mxu0
        %573 = vdwg.mxu0
        %574 = vmatprep.subr.bf16.mxu0 0
        %575 = vmatpush1.bf16.msra.mxu0 %v487
        %576 = vmatprep.subr.bf16.mxu0 0
        %577 = vmatpush1.bf16.msra.mxu0 %v490
        %578 = vmatprep.subr.bf16.mxu0 0
        %579 = vmatpush1.bf16.msra.mxu0 %v493
        %580 = vmatprep.subr.bf16.mxu0 0
        %581 = vmatpush1.bf16.msra.mxu0 %v496
        %582 = vmatprep.subr.bf16.mxu0 0
        %583 = vmatpush1.bf16.msra.mxu0 %v499
        %584 = vmatprep.subr.bf16.mxu0 0
        %585 = vmatpush1.bf16.msra.mxu0 %v502
        %586 = vmatprep.subr.bf16.mxu0 0
        %587 = vmatpush1.bf16.msra.mxu0 %v505
        %588 = vmatprep.subr.bf16.mxu0 0
        %589 = vmatpush1.bf16.msra.mxu0 %v508
        %590 = vmatprep.subr.bf16.mxu0 0
        %591 = vmatpush1.bf16.msra.mxu0 0
        %592 = vmatprep.subr.bf16.mxu0 0
        %593 = vmatpush1.bf16.msra.mxu0 0
        %594 = vmatprep.subr.bf16.mxu0 0
        %595 = vmatpush1.bf16.msra.mxu0 0
        %596 = vmatprep.subr.bf16.mxu0 0
        %597 = vmatpush1.bf16.msra.mxu0 0
        %598 = vmatprep.subr.bf16.mxu0 0
        %599 = vmatpush1.bf16.msra.mxu0 0
        %600 = vmatprep.subr.bf16.mxu0 0
        %601 = vmatpush1.bf16.msra.mxu0 0
        %602 = vmatprep.subr.bf16.mxu0 0
        %603 = vmatpush1.bf16.msra.mxu0 0
        %604 = vmatprep.subr.bf16.mxu0 0
        %605 = vmatpush1.bf16.msra.mxu0 0
        %606 = vmatprep.mubr.bf16.mxu0 0
        %607 = vmatmul.mubr.bf16.gmra.mrb[0].mxu0 %v355
        %v608 = vpop.f32.mrb[0].mxu0
        %v609 = vadd.f32 %v401, %v608
        %v610 = vpop.f32.mrb[0].mxu0
        %v611 = vpop.f32.mrb[0].mxu0
        %v612 = vpop.f32.mrb[0].mxu0
        %613 = vdwg.mxu0
        %615 = vrot.lane.b32.xlu0 %v568, 96
        %v616 = vpop.permute.xlu0 %615
        %618 = vrot.lane.b32.xlu0 %v568, 64
        %v619 = vpop.permute.xlu0 %618
        %621 = vrot.lane.b32.xlu0 %v568, 32
        %v622 = vpop.permute.xlu0 %621
        %v624 = vcombine.low %v568, %v619
        %v625 = vcombine.high %v568, %v619
        %v627 = vunpack.c.l.s4 1983009808
        %v628 = vunpack.c.0.s8 %v627
        %v629 = vlaneseq
        %v630 = vshrl.u32 %v629, 7
        %v631 = vsub.s32 %v628, %v630
        %v632 = vrot.slane %v624, %v631
        %v634 = vunpack.c.l.s4 1983009808
        %v635 = vunpack.c.0.s8 %v634
        %v636 = vlaneseq
        %v637 = vshrl.u32 %v636, 7
        %v638 = vsub.s32 %v635, %v637
        %v639 = vrot.slane %v625, %v638
        %v640 = vcombine.low %v616, %v622
        %v641 = vcombine.high %v616, %v622
        %v643 = vunpack.c.l.s4 1983009808
        %v644 = vunpack.c.0.s8 %v643
        %v645 = vlaneseq
        %v646 = vshrl.u32 %v645, 7
        %v647 = vsub.s32 %v644, %v646
        %v648 = vrot.slane %v640, %v647
        %v650 = vunpack.c.l.s4 1983009808
        %v651 = vunpack.c.0.s8 %v650
        %v652 = vlaneseq
        %v653 = vshrl.u32 %v652, 7
        %v654 = vsub.s32 %v651, %v653
        %v655 = vrot.slane %v641, %v654
        %v656 = vcombine.low %v632, %v648
        %v657 = vcombine.high %v632, %v648
        %v659 = vunpack.c.l.s4 1934713408
        %v660 = vunpack.c.0.s8 %v659
        %v661 = vlaneseq
        %v662 = vshrl.u32 %v661, 7
        %v663 = vsub.s32 %v660, %v662
        %v664 = vrot.slane %v656, %v663
        %v666 = vunpack.c.l.s4 1934713408
        %v667 = vunpack.c.0.s8 %v666
        %v668 = vlaneseq
        %v669 = vshrl.u32 %v668, 7
        %v670 = vsub.s32 %v667, %v669
        %v671 = vrot.slane %v657, %v670
        %v672 = vcombine.low %v639, %v655
        %v673 = vcombine.high %v639, %v655
        %v675 = vunpack.c.l.s4 1934713408
        %v676 = vunpack.c.0.s8 %v675
        %v677 = vlaneseq
        %v678 = vshrl.u32 %v677, 7
        %v679 = vsub.s32 %v676, %v678
        %v680 = vrot.slane %v672, %v679
        %v682 = vunpack.c.l.s4 1934713408
        %v683 = vunpack.c.0.s8 %v682
        %v684 = vlaneseq
        %v685 = vshrl.u32 %v684, 7
        %v686 = vsub.s32 %v683, %v685
        %v687 = vrot.slane %v673, %v686
        %v688 = vcombine.high %v664, 0.0
        %v689 = vcombine.high %v671, 0.0
        %v690 = vcombine.high %v680, 0.0
        %v691 = vcombine.high %v687, 0.0
        %v692 = vcombine.low %v664, %v671
        %v694 = vunpack.c.l.s4 1983009808
        %v695 = vunpack.c.0.s8 %v694
        %v696 = vlaneseq
        %v697 = vshrl.u32 %v696, 7
        %v698 = vsub.s32 %v695, %v697
        %v699 = vrot.slane %v692, %v698
        %v700 = vcombine.low %v688, %v689
        %v702 = vunpack.c.l.s4 1983009808
        %v703 = vunpack.c.0.s8 %v702
        %v704 = vlaneseq
        %v705 = vshrl.u32 %v704, 7
        %v706 = vsub.s32 %v703, %v705
        %v707 = vrot.slane %v700, %v706
        %v708 = vcombine.low %v680, %v687
        %v710 = vunpack.c.l.s4 1983009808
        %v711 = vunpack.c.0.s8 %v710
        %v712 = vlaneseq
        %v713 = vshrl.u32 %v712, 7
        %v714 = vsub.s32 %v711, %v713
        %v715 = vrot.slane %v708, %v714
        %v716 = vcombine.low %v690, %v691
        %v718 = vunpack.c.l.s4 1983009808
        %v719 = vunpack.c.0.s8 %v718
        %v720 = vlaneseq
        %v721 = vshrl.u32 %v720, 7
        %v722 = vsub.s32 %v719, %v721
        %v723 = vrot.slane %v716, %v722
        %v724 = vcombine.low %v699, %v707
        %v725 = vcombine.high %v699, %v707
        %v727 = vunpack.c.l.s4 1934713408
        %v728 = vunpack.c.0.s8 %v727
        %v729 = vlaneseq
        %v730 = vshrl.u32 %v729, 7
        %v731 = vsub.s32 %v728, %v730
        %v732 = vrot.slane %v724, %v731
        %v734 = vunpack.c.l.s4 1934713408
        %v735 = vunpack.c.0.s8 %v734
        %v736 = vlaneseq
        %v737 = vshrl.u32 %v736, 7
        %v738 = vsub.s32 %v735, %v737
        %v739 = vrot.slane %v725, %v738
        %v740 = vcombine.low %v715, %v723
        %v741 = vcombine.high %v715, %v723
        %v743 = vunpack.c.l.s4 1934713408
        %v744 = vunpack.c.0.s8 %v743
        %v745 = vlaneseq
        %v746 = vshrl.u32 %v745, 7
        %v747 = vsub.s32 %v744, %v746
        %v748 = vrot.slane %v740, %v747
        %v750 = vunpack.c.l.s4 1934713408
        %v751 = vunpack.c.0.s8 %v750
        %v752 = vlaneseq
        %v753 = vshrl.u32 %v752, 7
        %v754 = vsub.s32 %v751, %v753
        %v755 = vrot.slane %v741, %v754
        %v756 = vcombine.low %v732, %v748
        %v757 = vcombine.high %v732, %v748
        %v758 = vcombine.low %v739, %v755
        %v759 = vcombine.high %v739, %v755
        %761 = vrot.lane.b32.xlu0 %v570, 96
        %v762 = vpop.permute.xlu0 %761
        %764 = vrot.lane.b32.xlu0 %v570, 64
        %v765 = vpop.permute.xlu0 %764
        %767 = vrot.lane.b32.xlu0 %v570, 32
        %v768 = vpop.permute.xlu0 %767
        %v770 = vcombine.low %v570, %v765
        %v771 = vcombine.high %v570, %v765
        %v773 = vunpack.c.l.s4 1983009808
        %v774 = vunpack.c.0.s8 %v773
        %v775 = vlaneseq
        %v776 = vshrl.u32 %v775, 7
        %v777 = vsub.s32 %v774, %v776
        %v778 = vrot.slane %v770, %v777
        %v780 = vunpack.c.l.s4 1983009808
        %v781 = vunpack.c.0.s8 %v780
        %v782 = vlaneseq
        %v783 = vshrl.u32 %v782, 7
        %v784 = vsub.s32 %v781, %v783
        %v785 = vrot.slane %v771, %v784
        %v786 = vcombine.low %v762, %v768
        %v787 = vcombine.high %v762, %v768
        %v789 = vunpack.c.l.s4 1983009808
        %v790 = vunpack.c.0.s8 %v789
        %v791 = vlaneseq
        %v792 = vshrl.u32 %v791, 7
        %v793 = vsub.s32 %v790, %v792
        %v794 = vrot.slane %v786, %v793
        %v796 = vunpack.c.l.s4 1983009808
        %v797 = vunpack.c.0.s8 %v796
        %v798 = vlaneseq
        %v799 = vshrl.u32 %v798, 7
        %v800 = vsub.s32 %v797, %v799
        %v801 = vrot.slane %v787, %v800
        %v802 = vcombine.low %v778, %v794
        %v803 = vcombine.high %v778, %v794
        %v805 = vunpack.c.l.s4 1934713408
        %v806 = vunpack.c.0.s8 %v805
        %v807 = vlaneseq
        %v808 = vshrl.u32 %v807, 7
        %v809 = vsub.s32 %v806, %v808
        %v810 = vrot.slane %v802, %v809
        %v812 = vunpack.c.l.s4 1934713408
        %v813 = vunpack.c.0.s8 %v812
        %v814 = vlaneseq
        %v815 = vshrl.u32 %v814, 7
        %v816 = vsub.s32 %v813, %v815
        %v817 = vrot.slane %v803, %v816
        %v818 = vcombine.low %v785, %v801
        %v819 = vcombine.high %v785, %v801
        %v821 = vunpack.c.l.s4 1934713408
        %v822 = vunpack.c.0.s8 %v821
        %v823 = vlaneseq
        %v824 = vshrl.u32 %v823, 7
        %v825 = vsub.s32 %v822, %v824
        %v826 = vrot.slane %v818, %v825
        %v828 = vunpack.c.l.s4 1934713408
        %v829 = vunpack.c.0.s8 %v828
        %v830 = vlaneseq
        %v831 = vshrl.u32 %v830, 7
        %v832 = vsub.s32 %v829, %v831
        %v833 = vrot.slane %v819, %v832
        %v834 = vcombine.high %v810, 0.0
        %v835 = vcombine.high %v817, 0.0
        %v836 = vcombine.high %v826, 0.0
        %v837 = vcombine.high %v833, 0.0
        %v838 = vcombine.low %v810, %v817
        %v840 = vunpack.c.l.s4 1983009808
        %v841 = vunpack.c.0.s8 %v840
        %v842 = vlaneseq
        %v843 = vshrl.u32 %v842, 7
        %v844 = vsub.s32 %v841, %v843
        %v845 = vrot.slane %v838, %v844
        %v846 = vcombine.low %v834, %v835
        %v848 = vunpack.c.l.s4 1983009808
        %v849 = vunpack.c.0.s8 %v848
        %v850 = vlaneseq
        %v851 = vshrl.u32 %v850, 7
        %v852 = vsub.s32 %v849, %v851
        %v853 = vrot.slane %v846, %v852
        %v854 = vcombine.low %v826, %v833
        %v856 = vunpack.c.l.s4 1983009808
        %v857 = vunpack.c.0.s8 %v856
        %v858 = vlaneseq
        %v859 = vshrl.u32 %v858, 7
        %v860 = vsub.s32 %v857, %v859
        %v861 = vrot.slane %v854, %v860
        %v862 = vcombine.low %v836, %v837
        %v864 = vunpack.c.l.s4 1983009808
        %v865 = vunpack.c.0.s8 %v864
        %v866 = vlaneseq
        %v867 = vshrl.u32 %v866, 7
        %v868 = vsub.s32 %v865, %v867
        %v869 = vrot.slane %v862, %v868
        %v870 = vcombine.low %v845, %v853
        %v871 = vcombine.high %v845, %v853
        %v873 = vunpack.c.l.s4 1934713408
        %v874 = vunpack.c.0.s8 %v873
        %v875 = vlaneseq
        %v876 = vshrl.u32 %v875, 7
        %v877 = vsub.s32 %v874, %v876
        %v878 = vrot.slane %v870, %v877
        %v880 = vunpack.c.l.s4 1934713408
        %v881 = vunpack.c.0.s8 %v880
        %v882 = vlaneseq
        %v883 = vshrl.u32 %v882, 7
        %v884 = vsub.s32 %v881, %v883
        %v885 = vrot.slane %v871, %v884
        %v886 = vcombine.low %v861, %v869
        %v887 = vcombine.high %v861, %v869
        %v889 = vunpack.c.l.s4 1934713408
        %v890 = vunpack.c.0.s8 %v889
        %v891 = vlaneseq
        %v892 = vshrl.u32 %v891, 7
        %v893 = vsub.s32 %v890, %v892
        %v894 = vrot.slane %v886, %v893
        %v896 = vunpack.c.l.s4 1934713408
        %v897 = vunpack.c.0.s8 %v896
        %v898 = vlaneseq
        %v899 = vshrl.u32 %v898, 7
        %v900 = vsub.s32 %v897, %v899
        %v901 = vrot.slane %v887, %v900
        %v902 = vcombine.low %v878, %v894
        %v903 = vcombine.high %v878, %v894
        %v904 = vcombine.low %v885, %v901
        %v905 = vcombine.high %v885, %v901
        %907 = vrot.lane.b32.xlu0 %v609, 96
        %v908 = vpop.permute.xlu0 %907
        %910 = vrot.lane.b32.xlu0 %v609, 64
        %v911 = vpop.permute.xlu0 %910
        %913 = vrot.lane.b32.xlu0 %v609, 32
        %v914 = vpop.permute.xlu0 %913
        %v916 = vcombine.low %v609, %v911
        %v917 = vcombine.high %v609, %v911
        %v919 = vunpack.c.l.s4 1983009808
        %v920 = vunpack.c.0.s8 %v919
        %v921 = vlaneseq
        %v922 = vshrl.u32 %v921, 7
        %v923 = vsub.s32 %v920, %v922
        %v924 = vrot.slane %v916, %v923
        %v926 = vunpack.c.l.s4 1983009808
        %v927 = vunpack.c.0.s8 %v926
        %v928 = vlaneseq
        %v929 = vshrl.u32 %v928, 7
        %v930 = vsub.s32 %v927, %v929
        %v931 = vrot.slane %v917, %v930
        %v932 = vcombine.low %v908, %v914
        %v933 = vcombine.high %v908, %v914
        %v935 = vunpack.c.l.s4 1983009808
        %v936 = vunpack.c.0.s8 %v935
        %v937 = vlaneseq
        %v938 = vshrl.u32 %v937, 7
        %v939 = vsub.s32 %v936, %v938
        %v940 = vrot.slane %v932, %v939
        %v942 = vunpack.c.l.s4 1983009808
        %v943 = vunpack.c.0.s8 %v942
        %v944 = vlaneseq
        %v945 = vshrl.u32 %v944, 7
        %v946 = vsub.s32 %v943, %v945
        %v947 = vrot.slane %v933, %v946
        %v948 = vcombine.low %v924, %v940
        %v949 = vcombine.high %v924, %v940
        %v951 = vunpack.c.l.s4 1934713408
        %v952 = vunpack.c.0.s8 %v951
        %v953 = vlaneseq
        %v954 = vshrl.u32 %v953, 7
        %v955 = vsub.s32 %v952, %v954
        %v956 = vrot.slane %v948, %v955
        %v958 = vunpack.c.l.s4 1934713408
        %v959 = vunpack.c.0.s8 %v958
        %v960 = vlaneseq
        %v961 = vshrl.u32 %v960, 7
        %v962 = vsub.s32 %v959, %v961
        %v963 = vrot.slane %v949, %v962
        %v964 = vcombine.low %v931, %v947
        %v965 = vcombine.high %v931, %v947
        %v967 = vunpack.c.l.s4 1934713408
        %v968 = vunpack.c.0.s8 %v967
        %v969 = vlaneseq
        %v970 = vshrl.u32 %v969, 7
        %v971 = vsub.s32 %v968, %v970
        %v972 = vrot.slane %v964, %v971
        %v974 = vunpack.c.l.s4 1934713408
        %v975 = vunpack.c.0.s8 %v974
        %v976 = vlaneseq
        %v977 = vshrl.u32 %v976, 7
        %v978 = vsub.s32 %v975, %v977
        %v979 = vrot.slane %v965, %v978
        %v980 = vcombine.high %v956, 0.0
        %v981 = vcombine.high %v963, 0.0
        %v982 = vcombine.high %v972, 0.0
        %v983 = vcombine.high %v979, 0.0
        %v984 = vcombine.low %v956, %v963
        %v986 = vunpack.c.l.s4 1983009808
        %v987 = vunpack.c.0.s8 %v986
        %v988 = vlaneseq
        %v989 = vshrl.u32 %v988, 7
        %v990 = vsub.s32 %v987, %v989
        %v991 = vrot.slane %v984, %v990
        %v992 = vcombine.low %v980, %v981
        %v994 = vunpack.c.l.s4 1983009808
        %v995 = vunpack.c.0.s8 %v994
        %v996 = vlaneseq
        %v997 = vshrl.u32 %v996, 7
        %v998 = vsub.s32 %v995, %v997
        %v999 = vrot.slane %v992, %v998
        %v1000 = vcombine.low %v972, %v979
        %v1002 = vunpack.c.l.s4 1983009808
        %v1003 = vunpack.c.0.s8 %v1002
        %v1004 = vlaneseq
        %v1005 = vshrl.u32 %v1004, 7
        %v1006 = vsub.s32 %v1003, %v1005
        %v1007 = vrot.slane %v1000, %v1006
        %v1008 = vcombine.low %v982, %v983
        %v1010 = vunpack.c.l.s4 1983009808
        %v1011 = vunpack.c.0.s8 %v1010
        %v1012 = vlaneseq
        %v1013 = vshrl.u32 %v1012, 7
        %v1014 = vsub.s32 %v1011, %v1013
        %v1015 = vrot.slane %v1008, %v1014
        %v1016 = vcombine.low %v991, %v999
        %v1017 = vcombine.high %v991, %v999
        %v1019 = vunpack.c.l.s4 1934713408
        %v1020 = vunpack.c.0.s8 %v1019
        %v1021 = vlaneseq
        %v1022 = vshrl.u32 %v1021, 7
        %v1023 = vsub.s32 %v1020, %v1022
        %v1024 = vrot.slane %v1016, %v1023
        %v1026 = vunpack.c.l.s4 1934713408
        %v1027 = vunpack.c.0.s8 %v1026
        %v1028 = vlaneseq
        %v1029 = vshrl.u32 %v1028, 7
        %v1030 = vsub.s32 %v1027, %v1029
        %v1031 = vrot.slane %v1017, %v1030
        %v1032 = vcombine.low %v1007, %v1015
        %v1033 = vcombine.high %v1007, %v1015
        %v1035 = vunpack.c.l.s4 1934713408
        %v1036 = vunpack.c.0.s8 %v1035
        %v1037 = vlaneseq
        %v1038 = vshrl.u32 %v1037, 7
        %v1039 = vsub.s32 %v1036, %v1038
        %v1040 = vrot.slane %v1032, %v1039
        %v1042 = vunpack.c.l.s4 1934713408
        %v1043 = vunpack.c.0.s8 %v1042
        %v1044 = vlaneseq
        %v1045 = vshrl.u32 %v1044, 7
        %v1046 = vsub.s32 %v1043, %v1045
        %v1047 = vrot.slane %v1033, %v1046
        %v1048 = vcombine.low %v1024, %v1040
        %v1049 = vcombine.high %v1024, %v1040
        %v1050 = vcombine.low %v1031, %v1047
        %v1051 = vcombine.high %v1031, %v1047
        %v1052 = vlaneseq
        %v1053 = vshrl.u32 %v1052, 7
        %v1054 = vlaneseq
        %v1055 = vand.u32 %v1054, 127
        %vm1056 = vcmp.le.s32.totalorder %v1055, %v1053
        %v1057 = vpack.c.bf16 %v756, %v756
        %v1058 = vpack.c.bf16 %v757, %v757
        %v1059 = vpack.c.bf16 %v758, %v758
        %v1060 = vpack.c.bf16 %v759, %v759
        %v1061 = vpack.c.bf16 %v902, %v902
        %v1062 = vpack.c.bf16 %v903, %v903
        %v1063 = vpack.c.bf16 %v904, %v904
        %v1064 = vpack.c.bf16 %v905, %v905
        %vm1065 = vcmask 261120
        %v1067 = vsel %vm1065, %v1057, 0
        %v1070 = vsel %vm1065, %v1061, 0
        %1072 = vmatprep.subr.bf16.mxu0 0
        %1073 = vmatpush1.bf16.xpose.msra.mxu0 %v1070
        %1074 = vmatprep.subr.bf16.mxu0 0
        %1075 = vmatpush1.bf16.xpose.msra.mxu0 0
        %1076 = vmatprep.subr.bf16.mxu0 0
        %1077 = vmatpush1.bf16.xpose.msra.mxu0 0
        %1078 = vmatprep.subr.bf16.mxu0 0
        %1079 = vmatpush1.bf16.xpose.msra.mxu0 0
        %1080 = vmatprep.subr.bf16.mxu0 0
        %1081 = vmatpush1.bf16.xpose.msra.mxu0 0
        %1082 = vmatprep.subr.bf16.mxu0 0
        %1083 = vmatpush1.bf16.xpose.msra.mxu0 0
        %1084 = vmatprep.subr.bf16.mxu0 0
        %1085 = vmatpush1.bf16.xpose.msra.mxu0 0
        %1086 = vmatprep.subr.bf16.mxu0 0
        %1087 = vmatpush1.bf16.xpose.msra.mxu0 0
        %1088 = vmatprep.subr.bf16.mxu0 0
        %1089 = vmatpush1.bf16.xpose.msra.mxu0 0
        %1090 = vmatprep.subr.bf16.mxu0 0
        %1091 = vmatpush1.bf16.xpose.msra.mxu0 0
        %1092 = vmatprep.subr.bf16.mxu0 0
        %1093 = vmatpush1.bf16.xpose.msra.mxu0 0
        %1094 = vmatprep.subr.bf16.mxu0 0
        %1095 = vmatpush1.bf16.xpose.msra.mxu0 0
        %1096 = vmatprep.subr.bf16.mxu0 0
        %1097 = vmatpush1.bf16.xpose.msra.mxu0 0
        %1098 = vmatprep.subr.bf16.mxu0 0
        %1099 = vmatpush1.bf16.xpose.msra.mxu0 0
        %1100 = vmatprep.subr.bf16.mxu0 0
        %1101 = vmatpush1.bf16.xpose.msra.mxu0 0
        %1102 = vmatprep.subr.bf16.mxu0 0
        %1103 = vmatpush1.bf16.xpose.msra.mxu0 0
        %1104 = vmatprep.mubr.bf16.mxu0 0
        %1105 = vmatmul.mubr.bf16.gmra.mrb[0].mxu0 %v1067
        %v1106 = vpop.f32.mrb[0].mxu0
        %v1107 = vadd.f32 0.0, %v1106
        %v1108 = vpop.f32.mrb[0].mxu0
        %v1109 = vpop.f32.mrb[0].mxu0
        %v1110 = vpop.f32.mrb[0].mxu0
        %1111 = vdwg.mxu0
        %v1113 = vsel %vm1065, %v1058, 0
        %v1116 = vsel %vm1065, %v1062, 0
        %1118 = vmatprep.subr.bf16.mxu0 0
        %1119 = vmatpush1.bf16.xpose.msra.mxu0 %v1116
        %1120 = vmatprep.subr.bf16.mxu0 0
        %1121 = vmatpush1.bf16.xpose.msra.mxu0 0
        %1122 = vmatprep.subr.bf16.mxu0 0
        %1123 = vmatpush1.bf16.xpose.msra.mxu0 0
        %1124 = vmatprep.subr.bf16.mxu0 0
        %1125 = vmatpush1.bf16.xpose.msra.mxu0 0
        %1126 = vmatprep.subr.bf16.mxu0 0
        %1127 = vmatpush1.bf16.xpose.msra.mxu0 0
        %1128 = vmatprep.subr.bf16.mxu0 0
        %1129 = vmatpush1.bf16.xpose.msra.mxu0 0
        %1130 = vmatprep.subr.bf16.mxu0 0
        %1131 = vmatpush1.bf16.xpose.msra.mxu0 0
        %1132 = vmatprep.subr.bf16.mxu0 0
        %1133 = vmatpush1.bf16.xpose.msra.mxu0 0
        %1134 = vmatprep.subr.bf16.mxu0 0
        %1135 = vmatpush1.bf16.xpose.msra.mxu0 0
        %1136 = vmatprep.subr.bf16.mxu0 0
        %1137 = vmatpush1.bf16.xpose.msra.mxu0 0
        %1138 = vmatprep.subr.bf16.mxu0 0
        %1139 = vmatpush1.bf16.xpose.msra.mxu0 0
        %1140 = vmatprep.subr.bf16.mxu0 0
        %1141 = vmatpush1.bf16.xpose.msra.mxu0 0
        %1142 = vmatprep.subr.bf16.mxu0 0
        %1143 = vmatpush1.bf16.xpose.msra.mxu0 0
        %1144 = vmatprep.subr.bf16.mxu0 0
        %1145 = vmatpush1.bf16.xpose.msra.mxu0 0
        %1146 = vmatprep.subr.bf16.mxu0 0
        %1147 = vmatpush1.bf16.xpose.msra.mxu0 0
        %1148 = vmatprep.subr.bf16.mxu0 0
        %1149 = vmatpush1.bf16.xpose.msra.mxu0 0
        %1150 = vmatprep.mubr.bf16.mxu0 0
        %1151 = vmatmul.mubr.bf16.gmra.mrb[0].mxu0 %v1113
        %v1152 = vpop.f32.mrb[0].mxu0
        %v1153 = vadd.f32 0.0, %v1152
        %v1154 = vpop.f32.mrb[0].mxu0
        %v1155 = vpop.f32.mrb[0].mxu0
        %v1156 = vpop.f32.mrb[0].mxu0
        %1157 = vdwg.mxu0
        %v1159 = vsel %vm1065, %v1059, 0
        %v1162 = vsel %vm1065, %v1063, 0
        %1164 = vmatprep.subr.bf16.mxu0 0
        %1165 = vmatpush1.bf16.xpose.msra.mxu0 %v1162
        %1166 = vmatprep.subr.bf16.mxu0 0
        %1167 = vmatpush1.bf16.xpose.msra.mxu0 0
        %1168 = vmatprep.subr.bf16.mxu0 0
        %1169 = vmatpush1.bf16.xpose.msra.mxu0 0
        %1170 = vmatprep.subr.bf16.mxu0 0
        %1171 = vmatpush1.bf16.xpose.msra.mxu0 0
        %1172 = vmatprep.subr.bf16.mxu0 0
        %1173 = vmatpush1.bf16.xpose.msra.mxu0 0
        %1174 = vmatprep.subr.bf16.mxu0 0
        %1175 = vmatpush1.bf16.xpose.msra.mxu0 0
        %1176 = vmatprep.subr.bf16.mxu0 0
        %1177 = vmatpush1.bf16.xpose.msra.mxu0 0
        %1178 = vmatprep.subr.bf16.mxu0 0
        %1179 = vmatpush1.bf16.xpose.msra.mxu0 0
        %1180 = vmatprep.subr.bf16.mxu0 0
        %1181 = vmatpush1.bf16.xpose.msra.mxu0 0
        %1182 = vmatprep.subr.bf16.mxu0 0
        %1183 = vmatpush1.bf16.xpose.msra.mxu0 0
        %1184 = vmatprep.subr.bf16.mxu0 0
        %1185 = vmatpush1.bf16.xpose.msra.mxu0 0
        %1186 = vmatprep.subr.bf16.mxu0 0
        %1187 = vmatpush1.bf16.xpose.msra.mxu0 0
        %1188 = vmatprep.subr.bf16.mxu0 0
        %1189 = vmatpush1.bf16.xpose.msra.mxu0 0
        %1190 = vmatprep.subr.bf16.mxu0 0
        %1191 = vmatpush1.bf16.xpose.msra.mxu0 0
        %1192 = vmatprep.subr.bf16.mxu0 0
        %1193 = vmatpush1.bf16.xpose.msra.mxu0 0
        %1194 = vmatprep.subr.bf16.mxu0 0
        %1195 = vmatpush1.bf16.xpose.msra.mxu0 0
        %1196 = vmatprep.mubr.bf16.mxu0 0
        %1197 = vmatmul.mubr.bf16.gmra.mrb[0].mxu0 %v1159
        %v1198 = vpop.f32.mrb[0].mxu0
        %v1199 = vadd.f32 0.0, %v1198
        %v1200 = vpop.f32.mrb[0].mxu0
        %v1201 = vpop.f32.mrb[0].mxu0
        %v1202 = vpop.f32.mrb[0].mxu0
        %1203 = vdwg.mxu0
        %v1205 = vsel %vm1065, %v1060, 0
        %v1208 = vsel %vm1065, %v1064, 0
        %1210 = vmatprep.subr.bf16.mxu0 0
        %1211 = vmatpush1.bf16.xpose.msra.mxu0 %v1208
        %1212 = vmatprep.subr.bf16.mxu0 0
        %1213 = vmatpush1.bf16.xpose.msra.mxu0 0
        %1214 = vmatprep.subr.bf16.mxu0 0
        %1215 = vmatpush1.bf16.xpose.msra.mxu0 0
        %1216 = vmatprep.subr.bf16.mxu0 0
        %1217 = vmatpush1.bf16.xpose.msra.mxu0 0
        %1218 = vmatprep.subr.bf16.mxu0 0
        %1219 = vmatpush1.bf16.xpose.msra.mxu0 0
        %1220 = vmatprep.subr.bf16.mxu0 0
        %1221 = vmatpush1.bf16.xpose.msra.mxu0 0
        %1222 = vmatprep.subr.bf16.mxu0 0
        %1223 = vmatpush1.bf16.xpose.msra.mxu0 0
        %1224 = vmatprep.subr.bf16.mxu0 0
        %1225 = vmatpush1.bf16.xpose.msra.mxu0 0
        %1226 = vmatprep.subr.bf16.mxu0 0
        %1227 = vmatpush1.bf16.xpose.msra.mxu0 0
        %1228 = vmatprep.subr.bf16.mxu0 0
        %1229 = vmatpush1.bf16.xpose.msra.mxu0 0
        %1230 = vmatprep.subr.bf16.mxu0 0
        %1231 = vmatpush1.bf16.xpose.msra.mxu0 0
        %1232 = vmatprep.subr.bf16.mxu0 0
        %1233 = vmatpush1.bf16.xpose.msra.mxu0 0
        %1234 = vmatprep.subr.bf16.mxu0 0
        %1235 = vmatpush1.bf16.xpose.msra.mxu0 0
        %1236 = vmatprep.subr.bf16.mxu0 0
        %1237 = vmatpush1.bf16.xpose.msra.mxu0 0
        %1238 = vmatprep.subr.bf16.mxu0 0
        %1239 = vmatpush1.bf16.xpose.msra.mxu0 0
        %1240 = vmatprep.subr.bf16.mxu0 0
        %1241 = vmatpush1.bf16.xpose.msra.mxu0 0
        %1242 = vmatprep.mubr.bf16.mxu0 0
        %1243 = vmatmul.mubr.bf16.gmra.mrb[0].mxu0 %v1205
        %v1244 = vpop.f32.mrb[0].mxu0
        %v1245 = vadd.f32 0.0, %v1244
        %v1246 = vpop.f32.mrb[0].mxu0
        %v1247 = vpop.f32.mrb[0].mxu0
        %v1248 = vpop.f32.mrb[0].mxu0
        %1249 = vdwg.mxu0
        %v1250 = vmul.f32 %v1107, 0.17677669
        %v1251 = vmul.f32 %v1153, 0.17677669
        %v1252 = vmul.f32 %v1199, 0.17677669
        %v1253 = vmul.f32 %v1245, 0.17677669
        %v1254 = vsel %vm1056, 1, 0
        %vm1255 = vcmp.eq.s32.totalorder %v1254, 1
        %v1256 = vsel %vm1255, %v1250, -10000.0
        %v1257 = vsel %vm1255, %v1251, -10000.0
        %v1258 = vsel %vm1255, %v1252, -10000.0
        %v1259 = vsel %vm1255, %v1253, -10000.0
        %vm1260 = vcmask 64512
        %v1261 = vsel %vm1260, %v1256, -inf
        %1262 = vmax.xlane.f32.xlu0 %v1261
        %v1263 = vpop.xlane.xlu0 %1262
        %v1264 = vsel %vm1260, %v1257, -inf
        %1265 = vmax.xlane.f32.xlu0 %v1264
        %v1266 = vpop.xlane.xlu0 %1265
        %v1267 = vsel %vm1260, %v1258, -inf
        %1268 = vmax.xlane.f32.xlu0 %v1267
        %v1269 = vpop.xlane.xlu0 %1268
        %v1270 = vsel %vm1260, %v1259, -inf
        %1271 = vmax.xlane.f32.xlu0 %v1270
        %v1272 = vpop.xlane.xlu0 %1271
        %v1273 = vsub.f32 %v1256, %v1263
        %v1274 = vsub.f32 %v1257, %v1266
        %v1275 = vsub.f32 %v1258, %v1269
        %v1276 = vsub.f32 %v1259, %v1272
        %v1277 = vmul.f32 %v1273, 1.442695
        %v1278 = vpow.pop %v1277
        %v1279 = vmul.f32 %v1274, 1.442695
        %v1280 = vpow.pop %v1279
        %v1281 = vmul.f32 %v1275, 1.442695
        %v1282 = vpow.pop %v1281
        %v1283 = vmul.f32 %v1276, 1.442695
        %v1284 = vpow.pop %v1283
        %v1285 = vsel %vm1260, %v1278, 0.0
        %1286 = vadd.xlane.f32.xlu0 %v1285
        %v1287 = vpop.xlane.xlu0 %1286
        %v1288 = vsel %vm1260, %v1280, 0.0
        %1289 = vadd.xlane.f32.xlu0 %v1288
        %v1290 = vpop.xlane.xlu0 %1289
        %v1291 = vsel %vm1260, %v1282, 0.0
        %1292 = vadd.xlane.f32.xlu0 %v1291
        %v1293 = vpop.xlane.xlu0 %1292
        %v1294 = vsel %vm1260, %v1284, 0.0
        %1295 = vadd.xlane.f32.xlu0 %v1294
        %v1296 = vpop.xlane.xlu0 %1295
        %v1297 = vrcp.pop %v1287
        %v1298 = vrcp.pop %v1290
        %v1299 = vrcp.pop %v1293
        %v1300 = vrcp.pop %v1296
        %v1301 = vmul.f32 %v1278, %v1297
        %v1302 = vmul.f32 %v1280, %v1298
        %v1303 = vmul.f32 %v1282, %v1299
        %v1304 = vmul.f32 %v1284, %v1300
        %v1305 = vpack.c.bf16 %v1301, %v1301
        %v1306 = vpack.c.bf16 %v1302, %v1302
        %v1307 = vpack.c.bf16 %v1303, %v1303
        %v1308 = vpack.c.bf16 %v1304, %v1304
        %v1309 = vpack.c.bf16 %v1048, %v1048
        %v1310 = vpack.c.bf16 %v1049, %v1049
        %v1311 = vpack.c.bf16 %v1050, %v1050
        %v1312 = vpack.c.bf16 %v1051, %v1051
        %v1314 = vsel %vm1260, %v1305, 0
        %vm1316 = vcmask 1043456
        %v1318 = vsel %vm1316, %v1309, 0
        %1320 = vmatprep.subr.bf16.mxu0 0
        %1321 = vmatpush1.bf16.msra.mxu0 %v1318
        %1322 = vmatprep.subr.bf16.mxu0 0
        %1323 = vmatpush1.bf16.msra.mxu0 0
        %1324 = vmatprep.subr.bf16.mxu0 0
        %1325 = vmatpush1.bf16.msra.mxu0 0
        %1326 = vmatprep.subr.bf16.mxu0 0
        %1327 = vmatpush1.bf16.msra.mxu0 0
        %1328 = vmatprep.subr.bf16.mxu0 0
        %1329 = vmatpush1.bf16.msra.mxu0 0
        %1330 = vmatprep.subr.bf16.mxu0 0
        %1331 = vmatpush1.bf16.msra.mxu0 0
        %1332 = vmatprep.subr.bf16.mxu0 0
        %1333 = vmatpush1.bf16.msra.mxu0 0
        %1334 = vmatprep.subr.bf16.mxu0 0
        %1335 = vmatpush1.bf16.msra.mxu0 0
        %1336 = vmatprep.subr.bf16.mxu0 0
        %1337 = vmatpush1.bf16.msra.mxu0 0
        %1338 = vmatprep.subr.bf16.mxu0 0
        %1339 = vmatpush1.bf16.msra.mxu0 0
        %1340 = vmatprep.subr.bf16.mxu0 0
        %1341 = vmatpush1.bf16.msra.mxu0 0
        %1342 = vmatprep.subr.bf16.mxu0 0
        %1343 = vmatpush1.bf16.msra.mxu0 0
        %1344 = vmatprep.subr.bf16.mxu0 0
        %1345 = vmatpush1.bf16.msra.mxu0 0
        %1346 = vmatprep.subr.bf16.mxu0 0
        %1347 = vmatpush1.bf16.msra.mxu0 0
        %1348 = vmatprep.subr.bf16.mxu0 0
        %1349 = vmatpush1.bf16.msra.mxu0 0
        %1350 = vmatprep.subr.bf16.mxu0 0
        %1351 = vmatpush1.bf16.msra.mxu0 0
        %1352 = vmatprep.mubr.bf16.mxu0 0
        %1353 = vmatmul.mubr.bf16.gmra.mrb[0].mxu0 %v1314
        %v1354 = vpop.f32.mrb[0].mxu0
        %v1355 = vadd.f32 0.0, %v1354
        %v1356 = vpop.f32.mrb[0].mxu0
        %v1357 = vpop.f32.mrb[0].mxu0
        %v1358 = vpop.f32.mrb[0].mxu0
        %1359 = vdwg.mxu0
        %v1361 = vsel %vm1260, %v1306, 0
        %v1364 = vsel %vm1316, %v1310, 0
        %1366 = vmatprep.subr.bf16.mxu0 0
        %1367 = vmatpush1.bf16.msra.mxu0 %v1364
        %1368 = vmatprep.subr.bf16.mxu0 0
        %1369 = vmatpush1.bf16.msra.mxu0 0
        %1370 = vmatprep.subr.bf16.mxu0 0
        %1371 = vmatpush1.bf16.msra.mxu0 0
        %1372 = vmatprep.subr.bf16.mxu0 0
        %1373 = vmatpush1.bf16.msra.mxu0 0
        %1374 = vmatprep.subr.bf16.mxu0 0
        %1375 = vmatpush1.bf16.msra.mxu0 0
        %1376 = vmatprep.subr.bf16.mxu0 0
        %1377 = vmatpush1.bf16.msra.mxu0 0
        %1378 = vmatprep.subr.bf16.mxu0 0
        %1379 = vmatpush1.bf16.msra.mxu0 0
        %1380 = vmatprep.subr.bf16.mxu0 0
        %1381 = vmatpush1.bf16.msra.mxu0 0
        %1382 = vmatprep.subr.bf16.mxu0 0
        %1383 = vmatpush1.bf16.msra.mxu0 0
        %1384 = vmatprep.subr.bf16.mxu0 0
        %1385 = vmatpush1.bf16.msra.mxu0 0
        %1386 = vmatprep.subr.bf16.mxu0 0
        %1387 = vmatpush1.bf16.msra.mxu0 0
        %1388 = vmatprep.subr.bf16.mxu0 0
        %1389 = vmatpush1.bf16.msra.mxu0 0
        %1390 = vmatprep.subr.bf16.mxu0 0
        %1391 = vmatpush1.bf16.msra.mxu0 0
        %1392 = vmatprep.subr.bf16.mxu0 0
        %1393 = vmatpush1.bf16.msra.mxu0 0
        %1394 = vmatprep.subr.bf16.mxu0 0
        %1395 = vmatpush1.bf16.msra.mxu0 0
        %1396 = vmatprep.subr.bf16.mxu0 0
        %1397 = vmatpush1.bf16.msra.mxu0 0
        %1398 = vmatprep.mubr.bf16.mxu0 0
        %1399 = vmatmul.mubr.bf16.gmra.mrb[0].mxu0 %v1361
        %v1400 = vpop.f32.mrb[0].mxu0
        %v1401 = vadd.f32 0.0, %v1400
        %v1402 = vpop.f32.mrb[0].mxu0
        %v1403 = vpop.f32.mrb[0].mxu0
        %v1404 = vpop.f32.mrb[0].mxu0
        %1405 = vdwg.mxu0
        %v1407 = vsel %vm1260, %v1307, 0
        %v1410 = vsel %vm1316, %v1311, 0
        %1412 = vmatprep.subr.bf16.mxu0 0
        %1413 = vmatpush1.bf16.msra.mxu0 %v1410
        %1414 = vmatprep.subr.bf16.mxu0 0
        %1415 = vmatpush1.bf16.msra.mxu0 0
        %1416 = vmatprep.subr.bf16.mxu0 0
        %1417 = vmatpush1.bf16.msra.mxu0 0
        %1418 = vmatprep.subr.bf16.mxu0 0
        %1419 = vmatpush1.bf16.msra.mxu0 0
        %1420 = vmatprep.subr.bf16.mxu0 0
        %1421 = vmatpush1.bf16.msra.mxu0 0
        %1422 = vmatprep.subr.bf16.mxu0 0
        %1423 = vmatpush1.bf16.msra.mxu0 0
        %1424 = vmatprep.subr.bf16.mxu0 0
        %1425 = vmatpush1.bf16.msra.mxu0 0
        %1426 = vmatprep.subr.bf16.mxu0 0
        %1427 = vmatpush1.bf16.msra.mxu0 0
        %1428 = vmatprep.subr.bf16.mxu0 0
        %1429 = vmatpush1.bf16.msra.mxu0 0
        %1430 = vmatprep.subr.bf16.mxu0 0
        %1431 = vmatpush1.bf16.msra.mxu0 0
        %1432 = vmatprep.subr.bf16.mxu0 0
        %1433 = vmatpush1.bf16.msra.mxu0 0
        %1434 = vmatprep.subr.bf16.mxu0 0
        %1435 = vmatpush1.bf16.msra.mxu0 0
        %1436 = vmatprep.subr.bf16.mxu0 0
        %1437 = vmatpush1.bf16.msra.mxu0 0
        %1438 = vmatprep.subr.bf16.mxu0 0
        %1439 = vmatpush1.bf16.msra.mxu0 0
        %1440 = vmatprep.subr.bf16.mxu0 0
        %1441 = vmatpush1.bf16.msra.mxu0 0
        %1442 = vmatprep.subr.bf16.mxu0 0
        %1443 = vmatpush1.bf16.msra.mxu0 0
        %1444 = vmatprep.mubr.bf16.mxu0 0
        %1445 = vmatmul.mubr.bf16.gmra.mrb[0].mxu0 %v1407
        %v1446 = vpop.f32.mrb[0].mxu0
        %v1447 = vadd.f32 0.0, %v1446
        %v1448 = vpop.f32.mrb[0].mxu0
        %v1449 = vpop.f32.mrb[0].mxu0
        %v1450 = vpop.f32.mrb[0].mxu0
        %1451 = vdwg.mxu0
        %v1453 = vsel %vm1260, %v1308, 0
        %v1456 = vsel %vm1316, %v1312, 0
        %1458 = vmatprep.subr.bf16.mxu0 0
        %1459 = vmatpush1.bf16.msra.mxu0 %v1456
        %1460 = vmatprep.subr.bf16.mxu0 0
        %1461 = vmatpush1.bf16.msra.mxu0 0
        %1462 = vmatprep.subr.bf16.mxu0 0
        %1463 = vmatpush1.bf16.msra.mxu0 0
        %1464 = vmatprep.subr.bf16.mxu0 0
        %1465 = vmatpush1.bf16.msra.mxu0 0
        %1466 = vmatprep.subr.bf16.mxu0 0
        %1467 = vmatpush1.bf16.msra.mxu0 0
        %1468 = vmatprep.subr.bf16.mxu0 0
        %1469 = vmatpush1.bf16.msra.mxu0 0
        %1470 = vmatprep.subr.bf16.mxu0 0
        %1471 = vmatpush1.bf16.msra.mxu0 0
        %1472 = vmatprep.subr.bf16.mxu0 0
        %1473 = vmatpush1.bf16.msra.mxu0 0
        %1474 = vmatprep.subr.bf16.mxu0 0
        %1475 = vmatpush1.bf16.msra.mxu0 0
        %1476 = vmatprep.subr.bf16.mxu0 0
        %1477 = vmatpush1.bf16.msra.mxu0 0
        %1478 = vmatprep.subr.bf16.mxu0 0
        %1479 = vmatpush1.bf16.msra.mxu0 0
        %1480 = vmatprep.subr.bf16.mxu0 0
        %1481 = vmatpush1.bf16.msra.mxu0 0
        %1482 = vmatprep.subr.bf16.mxu0 0
        %1483 = vmatpush1.bf16.msra.mxu0 0
        %1484 = vmatprep.subr.bf16.mxu0 0
        %1485 = vmatpush1.bf16.msra.mxu0 0
        %1486 = vmatprep.subr.bf16.mxu0 0
        %1487 = vmatpush1.bf16.msra.mxu0 0
        %1488 = vmatprep.subr.bf16.mxu0 0
        %1489 = vmatpush1.bf16.msra.mxu0 0
        %1490 = vmatprep.mubr.bf16.mxu0 0
        %1491 = vmatmul.mubr.bf16.gmra.mrb[0].mxu0 %v1453
        %v1492 = vpop.f32.mrb[0].mxu0
        %v1493 = vadd.f32 0.0, %v1492
        %v1494 = vpop.f32.mrb[0].mxu0
        %v1495 = vpop.f32.mrb[0].mxu0
        %v1496 = vpop.f32.mrb[0].mxu0
        %1497 = vdwg.mxu0
        %v1498 = vcombine.low %v1355, %v1447
        %v1499 = vcombine.high %v1355, %v1447
        %v1501 = vunpack.c.l.s4 1983009808
        %v1502 = vunpack.c.0.s8 %v1501
        %v1503 = vlaneseq
        %v1504 = vshrl.u32 %v1503, 7
        %v1505 = vsub.s32 %v1502, %v1504
        %v1506 = vrot.slane %v1498, %v1505
        %v1508 = vunpack.c.l.s4 1983009808
        %v1509 = vunpack.c.0.s8 %v1508
        %v1510 = vlaneseq
        %v1511 = vshrl.u32 %v1510, 7
        %v1512 = vsub.s32 %v1509, %v1511
        %v1513 = vrot.slane %v1499, %v1512
        %v1514 = vcombine.low %v1401, %v1493
        %v1515 = vcombine.high %v1401, %v1493
        %v1517 = vunpack.c.l.s4 1983009808
        %v1518 = vunpack.c.0.s8 %v1517
        %v1519 = vlaneseq
        %v1520 = vshrl.u32 %v1519, 7
        %v1521 = vsub.s32 %v1518, %v1520
        %v1522 = vrot.slane %v1514, %v1521
        %v1524 = vunpack.c.l.s4 1983009808
        %v1525 = vunpack.c.0.s8 %v1524
        %v1526 = vlaneseq
        %v1527 = vshrl.u32 %v1526, 7
        %v1528 = vsub.s32 %v1525, %v1527
        %v1529 = vrot.slane %v1515, %v1528
        %v1530 = vcombine.low %v1506, %v1522
        %v1531 = vcombine.high %v1506, %v1522
        %v1533 = vunpack.c.l.s4 1934713408
        %v1534 = vunpack.c.0.s8 %v1533
        %v1535 = vlaneseq
        %v1536 = vshrl.u32 %v1535, 7
        %v1537 = vsub.s32 %v1534, %v1536
        %v1538 = vrot.slane %v1530, %v1537
        %v1540 = vunpack.c.l.s4 1934713408
        %v1541 = vunpack.c.0.s8 %v1540
        %v1542 = vlaneseq
        %v1543 = vshrl.u32 %v1542, 7
        %v1544 = vsub.s32 %v1541, %v1543
        %v1545 = vrot.slane %v1531, %v1544
        %v1546 = vcombine.low %v1513, %v1529
        %v1547 = vcombine.high %v1513, %v1529
        %v1549 = vunpack.c.l.s4 1934713408
        %v1550 = vunpack.c.0.s8 %v1549
        %v1551 = vlaneseq
        %v1552 = vshrl.u32 %v1551, 7
        %v1553 = vsub.s32 %v1550, %v1552
        %v1554 = vrot.slane %v1546, %v1553
        %v1556 = vunpack.c.l.s4 1934713408
        %v1557 = vunpack.c.0.s8 %v1556
        %v1558 = vlaneseq
        %v1559 = vshrl.u32 %v1558, 7
        %v1560 = vsub.s32 %v1557, %v1559
        %v1561 = vrot.slane %v1547, %v1560
        %v1562 = vcombine.high %v1538, 0.0
        %v1563 = vcombine.high %v1545, 0.0
        %v1564 = vcombine.high %v1554, 0.0
        %v1565 = vcombine.high %v1561, 0.0
        %v1566 = vcombine.low %v1538, %v1545
        %v1568 = vunpack.c.l.s4 1983009808
        %v1569 = vunpack.c.0.s8 %v1568
        %v1570 = vlaneseq
        %v1571 = vshrl.u32 %v1570, 7
        %v1572 = vsub.s32 %v1569, %v1571
        %v1573 = vrot.slane %v1566, %v1572
        %v1574 = vcombine.low %v1562, %v1563
        %v1576 = vunpack.c.l.s4 1983009808
        %v1577 = vunpack.c.0.s8 %v1576
        %v1578 = vlaneseq
        %v1579 = vshrl.u32 %v1578, 7
        %v1580 = vsub.s32 %v1577, %v1579
        %v1581 = vrot.slane %v1574, %v1580
        %v1582 = vcombine.low %v1554, %v1561
        %v1584 = vunpack.c.l.s4 1983009808
        %v1585 = vunpack.c.0.s8 %v1584
        %v1586 = vlaneseq
        %v1587 = vshrl.u32 %v1586, 7
        %v1588 = vsub.s32 %v1585, %v1587
        %v1589 = vrot.slane %v1582, %v1588
        %v1590 = vcombine.low %v1564, %v1565
        %v1592 = vunpack.c.l.s4 1983009808
        %v1593 = vunpack.c.0.s8 %v1592
        %v1594 = vlaneseq
        %v1595 = vshrl.u32 %v1594, 7
        %v1596 = vsub.s32 %v1593, %v1595
        %v1597 = vrot.slane %v1590, %v1596
        %v1598 = vcombine.low %v1573, %v1581
        %v1599 = vcombine.high %v1573, %v1581
        %v1601 = vunpack.c.l.s4 1934713408
        %v1602 = vunpack.c.0.s8 %v1601
        %v1603 = vlaneseq
        %v1604 = vshrl.u32 %v1603, 7
        %v1605 = vsub.s32 %v1602, %v1604
        %v1606 = vrot.slane %v1598, %v1605
        %v1608 = vunpack.c.l.s4 1934713408
        %v1609 = vunpack.c.0.s8 %v1608
        %v1610 = vlaneseq
        %v1611 = vshrl.u32 %v1610, 7
        %v1612 = vsub.s32 %v1609, %v1611
        %v1613 = vrot.slane %v1599, %v1612
        %v1614 = vcombine.low %v1589, %v1597
        %v1615 = vcombine.high %v1589, %v1597
        %v1617 = vunpack.c.l.s4 1934713408
        %v1618 = vunpack.c.0.s8 %v1617
        %v1619 = vlaneseq
        %v1620 = vshrl.u32 %v1619, 7
        %v1621 = vsub.s32 %v1618, %v1620
        %v1622 = vrot.slane %v1614, %v1621
        %v1624 = vunpack.c.l.s4 1934713408
        %v1625 = vunpack.c.0.s8 %v1624
        %v1626 = vlaneseq
        %v1627 = vshrl.u32 %v1626, 7
        %v1628 = vsub.s32 %v1625, %v1627
        %v1629 = vrot.slane %v1615, %v1628
        %v1630 = vcombine.low %v1606, %v1622
        %v1631 = vcombine.high %v1606, %v1622
        %v1632 = vcombine.low %v1613, %v1629
        %v1633 = vcombine.high %v1613, %v1629
        %1635 = vrot.lane.b32.xlu0 %v1631, 32
        %v1636 = vpop.permute.xlu0 %1635
        %1639 = vrot.lane.b32.xlu0 %v1632, 64
        %v1640 = vpop.permute.xlu0 %1639
        %1643 = vrot.lane.b32.xlu0 %v1633, 96
        %v1644 = vpop.permute.xlu0 %1643
        %v1646 = vsel %vm1065, %v1630, %v1636
        %vm1647 = vcmask 523264
        %v1648 = vsel %vm1647, %v1646, %v1640
        %vm1649 = vcmask 785408
        %v1650 = vsel %vm1649, %v1648, %v1644
        %v1651 = vpack.c.bf16 %v1650, %v1650
        %v1652 = vld [vmem:[#allocation7] sm:$0xf]
        %v1653 = vld [vmem:[#allocation7 + $0x4] sm:$0xf]
        %v1654 = vld [vmem:[#allocation7 + $0x8] sm:$0xf]
        %v1655 = vld [vmem:[#allocation7 + $0xc] sm:$0xf]
        %v1656 = vld [vmem:[#allocation7 + $0x10] sm:$0xf]
        %v1657 = vld [vmem:[#allocation7 + $0x14] sm:$0xf]
        %v1658 = vld [vmem:[#allocation7 + $0x18] sm:$0xf]
        %v1659 = vld [vmem:[#allocation7 + $0x1c] sm:$0xf]
        %v1660 = vld [vmem:[#allocation7 + $0x20] sm:$0xf]
        %v1661 = vld [vmem:[#allocation7 + $0x24] sm:$0xf]
        %v1662 = vld [vmem:[#allocation7 + $0x28] sm:$0xf]
        %v1663 = vld [vmem:[#allocation7 + $0x2c] sm:$0xf]
        %v1664 = vld [vmem:[#allocation7 + $0x30] sm:$0xf]
        %v1665 = vld [vmem:[#allocation7 + $0x34] sm:$0xf]
        %v1666 = vld [vmem:[#allocation7 + $0x38] sm:$0xf]
        %v1667 = vld [vmem:[#allocation7 + $0x3c] sm:$0xf]
        %v1668 = vld [vmem:[%s6] sm:$0x1]
        %v1670 = vlaneseq
        %v1671 = vshrl.u32 %v1670, 7
        %v1672 = vsub.s32 0, %v1671
        %v1673 = vrot.slane %v1668, %v1672
        %v1691 = vunpack.c.l.b16 %v1652
        %v1692 = vunpack.c.l.b16 %v1653
        %v1693 = vunpack.c.l.b16 %v1654
        %v1694 = vunpack.c.l.b16 %v1655
        %v1695 = vunpack.c.l.b16 %v1656
        %v1696 = vunpack.c.l.b16 %v1657
        %v1697 = vunpack.c.l.b16 %v1658
        %v1698 = vunpack.c.l.b16 %v1659
        %v1699 = vunpack.c.l.b16 %v1660
        %v1700 = vunpack.c.l.b16 %v1661
        %v1701 = vunpack.c.l.b16 %v1662
        %v1702 = vunpack.c.l.b16 %v1663
        %v1703 = vunpack.c.l.b16 %v1664
        %v1704 = vunpack.c.l.b16 %v1665
        %v1705 = vunpack.c.l.b16 %v1666
        %v1706 = vunpack.c.l.b16 %v1667
        %v1707 = vpack.c.b16 %v1692, %v1691
        %v1708 = vpack.c.b16 %v1694, %v1693
        %v1709 = vpack.c.b16 %v1696, %v1695
        %v1710 = vpack.c.b16 %v1698, %v1697
        %v1711 = vpack.c.b16 %v1700, %v1699
        %v1712 = vpack.c.b16 %v1702, %v1701
        %v1713 = vpack.c.b16 %v1704, %v1703
        %v1714 = vpack.c.b16 %v1706, %v1705
        %1723 = vmatprep.subr.bf16.mxu0 0
        %1724 = vmatpush1.bf16.msra.mxu0 %v1707
        %1725 = vmatprep.subr.bf16.mxu0 0
        %1726 = vmatpush1.bf16.msra.mxu0 %v1708
        %1727 = vmatprep.subr.bf16.mxu0 0
        %1728 = vmatpush1.bf16.msra.mxu0 %v1709
        %1729 = vmatprep.subr.bf16.mxu0 0
        %1730 = vmatpush1.bf16.msra.mxu0 %v1710
        %1731 = vmatprep.subr.bf16.mxu0 0
        %1732 = vmatpush1.bf16.msra.mxu0 %v1711
        %1733 = vmatprep.subr.bf16.mxu0 0
        %1734 = vmatpush1.bf16.msra.mxu0 %v1712
        %1735 = vmatprep.subr.bf16.mxu0 0
        %1736 = vmatpush1.bf16.msra.mxu0 %v1713
        %1737 = vmatprep.subr.bf16.mxu0 0
        %1738 = vmatpush1.bf16.msra.mxu0 %v1714
        %1739 = vmatprep.subr.bf16.mxu0 0
        %1740 = vmatpush1.bf16.msra.mxu0 0
        %1741 = vmatprep.subr.bf16.mxu0 0
        %1742 = vmatpush1.bf16.msra.mxu0 0
        %1743 = vmatprep.subr.bf16.mxu0 0
        %1744 = vmatpush1.bf16.msra.mxu0 0
        %1745 = vmatprep.subr.bf16.mxu0 0
        %1746 = vmatpush1.bf16.msra.mxu0 0
        %1747 = vmatprep.subr.bf16.mxu0 0
        %1748 = vmatpush1.bf16.msra.mxu0 0
        %1749 = vmatprep.subr.bf16.mxu0 0
        %1750 = vmatpush1.bf16.msra.mxu0 0
        %1751 = vmatprep.subr.bf16.mxu0 0
        %1752 = vmatpush1.bf16.msra.mxu0 0
        %1753 = vmatprep.subr.bf16.mxu0 0
        %1754 = vmatpush1.bf16.msra.mxu0 0
        %1755 = vmatprep.mubr.bf16.mxu0 0
        %1756 = vmatmul.mubr.bf16.gmra.mrb[0].mxu0 %v1651
        %v1757 = vpop.f32.mrb[0].mxu0
        %v1758 = vadd.f32 %v1673, %v1757
        %v1759 = vpop.f32.mrb[0].mxu0
        %v1760 = vpop.f32.mrb[0].mxu0
        %v1761 = vpop.f32.mrb[0].mxu0
        %1762 = vdwg.mxu0
        %v1763 = vadd.f32 %v324, %v1758
        %1764 = vst [vmem:[%s322] sm:$0xff] %v1763
        %s1765 = sand.u32 %s185, 1
        %s1766 = scalar_lea.sflag [#allocation4], %s1765
        %s1767 = sand.u32 %s185, 1
        %s1768 = smul.addr %s1767, 8
        %s1769 = scalar_lea.vmem [#allocation8], %s1768
        // Predicated region
        $region61: #{tpu_custom_call.1} parent=47 // pred_check
          %p1770 = pneg %p195
        $region62: #{tpu_custom_call.1} parent=47 // pred_check_branch
          %1772 = sbr.rel (%p1770) target = $region64
        $region63: #{tpu_custom_call.1} parent=47 // pred_region
          %s1774 = ssub.s32 128, 128
          %1775 = vsyncadd %s1766, %s1774
          %s1776 = smul.addr %s25, 128
          %s1777 = scalar_lea.hbm %s7, %s1776
          %s1779 = sshll.u32 %s1769, 4
          %s1780 = int_to_ptr.vmem [resolvable:$true] %s1779
          %1782 = dma.vmem_to_hbm [thread:$0]  %s1780, 128, %s1777, %s1766
        $region64: #{tpu_custom_call.1} parent=47 // pred_fallthru
          _
      $region48: #{tpu_custom_call.1} parent=5 // pred_fallthru
        _
      %p1783 = scmp.le.s32.totalorder 2, %s20
      // Predicated region
      $region65: #{tpu_custom_call.1} parent=5 // pred_check
        %p1784 = pneg %p1783
      $region66: #{tpu_custom_call.1} parent=5 // pred_check_branch
        %1786 = sbr.rel (%p1784) target = $region68
      $region67: #{tpu_custom_call.1} parent=5 // pred_region
        %s1787 = ssub.s32 %s20, 2
        // Predicated region
        $region69: #{tpu_custom_call.1} parent=67 // pred_check
          %p1788 = pneg %p201
        $region70: #{tpu_custom_call.1} parent=67 // pred_check_branch
          %1790 = sbr.rel (%p1788) target = $region72
        $region71: #{tpu_custom_call.1} parent=67 // pred_region
          %s1791 = sand.u32 %s186, 1
          %s1792 = scalar_lea.sflag [#allocation4], %s1791
          %s1793 = sand.u32 %s186, 1
          %s1794 = smul.addr %s1793, 8
          %s1795 = scalar_lea.vmem [#allocation8], %s1794
          %1796 = dma.done %s1792, 128
        $region72: #{tpu_custom_call.1} parent=67 // pred_fallthru
          _
      $region68: #{tpu_custom_call.1} parent=5 // pred_fallthru
        _
    $region6: #{tpu_custom_call.1} parent=1 // loop_footer
      %s24 = sadd.s32 1, %s20
    $region7: #{tpu_custom_call.1} parent=1 // loop_footer_branch
      %19 = sbr.rel target = $region3
    $region8: #{tpu_custom_call.1} parent=1 // loop_exit
      _
    %1797 = vsyncpa [#allocation3], 1
    %s1798 = scalar_lea.sflag [#allocation3], 1
    %1799 = vsyncpa %s1798, 1
    %1800 = vsyncpa [#allocation6], 1
    %1801 = vsyncpa [#allocation4], 1
    %s1802 = scalar_lea.sflag [#allocation4], 1
    %1803 = vsyncpa %s1802, 1

</llo_original>
